<compile_context>
chip_gen: v6e
topology: v6e:2x2x1
jax: 0.10.0
libtpu: 0.0.40
codegen_flags: <defaults>
</compile_context>

<pallas_src>
import functools

import jax
import jax.numpy as jnp
from jax.experimental import pallas as pl
from jax.experimental.pallas import tpu as pltpu


# ----------------------------------------------------------------------------- config
def _round_up(x, m):
    return (x + m - 1) // m * m


def _tpu_config():
    """Tile sizes / scoped VMEM limit per generation (v7x: 64 MiB, v5e/v6e: 128 MiB)."""
    try:
        vmem = int(getattr(pltpu.get_tpu_info(), "vmem_capacity_bytes", 64 * 2 ** 20))
    except Exception:
        vmem = 64 * 2 ** 20
    if vmem >= 96 * 2 ** 20:   # v5e / v6e (128 MiB VMEM) -> larger tiles
        return {"tm": 512, "tn": 1024, "tk": 1024, "tc": 1024,
                "vmem_limit": 96 * 2 ** 20}
    # v7x (64 MiB VMEM) -> roughly half the per-tile footprint
    return {"tm": 512, "tn": 512, "tk": 512, "tc": 512,
            "vmem_limit": 48 * 2 ** 20}


_CFG = _tpu_config()


def _pad2(x, row_mult, col_mult):
    m, n = x.shape
    mp, np_ = _round_up(m, row_mult), _round_up(n, col_mult)
    if (mp, np_) != (m, n):
        x = jnp.pad(x, ((0, mp - m), (0, np_ - n)))
    return x


# ----------------------------------------------------------------------------- fused tiled matmul
def _epilogue(y, bias_ref, rs_ref, act):
    if rs_ref is not None:
        y = y * rs_ref[...]              # (tm, 1) broadcast over lanes
    if bias_ref is not None:
        y = y + bias_ref[...]            # (1, tn) broadcast over sublanes
    if act == "tanh":
        y = jnp.tanh(y)
    elif act == "relu":
        y = jnp.maximum(y, 0.0)
    elif act == "elu":
        # exp clamped to <=0 so the untaken branch never overflows
        y = jnp.where(y > 0.0, y, jnp.exp(jnp.minimum(y, 0.0)) - 1.0)
    return y


def _mm_kernel_1k(a_ref, b_ref, *rest, act, has_bias, has_rs):
    """Single K tile: no accumulator, direct epilogue + store."""
    n_extra = int(has_bias) + int(has_rs)
    bias_ref = rest[0] if has_bias else None
    rs_ref = rest[int(has_bias)] if has_rs else None
    o_ref = rest[n_extra]
    y = jnp.dot(a_ref[...].astype(jnp.bfloat16),
                b_ref[...].astype(jnp.bfloat16),
                preferred_element_type=jnp.float32)
    o_ref[...] = _epilogue(y, bias_ref, rs_ref, act).astype(o_ref.dtype)


def _mm_kernel_acc(a_ref, b_ref, *rest, act, has_bias, has_rs):
    """K-accumulating path: VMEM f32 accumulator, epilogue fused into the finalize."""
    n_extra = int(has_bias) + int(has_rs)
    bias_ref = rest[0] if has_bias else None
    rs_ref = rest[int(has_bias)] if has_rs else None
    o_ref = rest[n_extra]
    acc_ref = rest[n_extra + 1]

    k = pl.program_id(2)

    @pl.when(k == 0)
    def _():
        acc_ref[...] = jnp.zeros_like(acc_ref)

    acc_ref[...] += jnp.dot(a_ref[...].astype(jnp.bfloat16),
                            b_ref[...].astype(jnp.bfloat16),
                            preferred_element_type=jnp.float32)

    @pl.when(k == pl.num_programs(2) - 1)
    def _():
        o_ref[...] = _epilogue(acc_ref[...], bias_ref, rs_ref, act).astype(o_ref.dtype)


def fused_matmul(a, b, bias=None, row_scale=None, act="none"):
    """act(row_scale * (a @ b) + bias), tiled; lane-dense f32 output.

    Inputs are zero-padded to tile multiples (exact for matmul + bias + tanh/relu/elu)
    and the result is sliced back.  Operands stay f32 in HBM (no extra cast pass for
    unreused operands) and are cast to bf16 in-kernel for the MXU.
    """
    m, k_dim = a.shape
    k2, n = b.shape
    assert k_dim == k2
    tm = min(_CFG["tm"], _round_up(m, 8))
    tn = min(_CFG["tn"], _round_up(n, 128))
    tk = min(_CFG["tk"], _round_up(k_dim, 128))
    ap = _pad2(a.astype(jnp.float32), tm, tk)
    bp = _pad2(b.astype(jnp.float32), tk, tn)
    mp, kp = ap.shape
    np_ = bp.shape[1]
    gk = kp // tk
    single_k = (gk == 1)

    operands = [ap, bp]
    if single_k:
        in_specs = [pl.BlockSpec((tm, tk), lambda i, j: (i, 0)),
                    pl.BlockSpec((tk, tn), lambda i, j: (0, j))]
    else:
        in_specs = [pl.BlockSpec((tm, tk), lambda i, j, kk: (i, kk)),
                    pl.BlockSpec((tk, tn), lambda i, j, kk: (kk, j))]
    if bias is not None:
        operands.append(_pad2(bias.astype(jnp.float32).reshape(1, n), 1, tn))
        in_specs.append(pl.BlockSpec((1, tn), (lambda i, j: (0, j)) if single_k
                                     else (lambda i, j, kk: (0, j))))
    if row_scale is not None:
        operands.append(_pad2(row_scale.astype(jnp.float32).reshape(m, 1), tm, 1))
        in_specs.append(pl.BlockSpec((tm, 1), (lambda i, j: (i, 0)) if single_k
                                     else (lambda i, j, kk: (i, 0))))

    if single_k:
        grid = (mp // tm, np_ // tn)
        out_specs = pl.BlockSpec((tm, tn), lambda i, j: (i, j))
        scratch = []
        sem = ("parallel", "parallel")
        kern = _mm_kernel_1k
    else:
        grid = (mp // tm, np_ // tn, gk)
        out_specs = pl.BlockSpec((tm, tn), lambda i, j, kk: (i, j))
        scratch = [pltpu.VMEM((tm, tn), jnp.float32)]
        sem = ("parallel", "parallel", "arbitrary")
        kern = _mm_kernel_acc

    out = pl.pallas_call(
        functools.partial(kern, act=act,
                          has_bias=bias is not None, has_rs=row_scale is not None),
        out_shape=jax.ShapeDtypeStruct((mp, np_), jnp.float32),
        grid_spec=pltpu.PrefetchScalarGridSpec(
            num_scalar_prefetch=0,
            grid=grid,
            in_specs=in_specs,
            out_specs=out_specs,
            scratch_shapes=scratch),
        compiler_params=pltpu.CompilerParams(
            dimension_semantics=sem,
            vmem_limit_bytes=_CFG["vmem_limit"]),
    )(*operands)
    return out[:m, :n]


def pallas_linear(x, w, b, act="none"):
    return fused_matmul(x, w, bias=b, act=act)


# ----------------------------------------------------------------------------- FastGT combine
def _combine_kernel(w_ref, stack_ref, comb_ref, rowsum_ref, acc_ref, *, n_ch):
    j = pl.program_id(1)

    @pl.when(j == 0)
    def _():
        acc_ref[...] = jnp.zeros_like(acc_ref)

    # channel weights are scalars in SMEM; the static channel loop unrolls.
    combined = w_ref[0] * stack_ref[0]
    for ci in range(1, n_ch):
        combined = combined + w_ref[ci] * stack_ref[ci]
    comb_ref[...] = combined
    acc_ref[...] += jnp.sum(combined, axis=-1, keepdims=True)    # row-degree accumulator

    @pl.when(j == pl.num_programs(1) - 1)
    def _():
        rowsum_ref[...] = acc_ref[...]


def pallas_combine(weights, stack):
    """sum_c w[c] * A_c, tiled over (N, N); also returns the combined row-degree
    (fused second output -> no extra N^2 pass for the GraphConv normalisation)."""
    c, n, _ = stack.shape
    t = min(_CFG["tc"], _round_up(n, 128))
    np_ = _round_up(n, t)
    stack_p = stack.astype(jnp.float32)
    if np_ != n:
        stack_p = jnp.pad(stack_p, ((0, 0), (0, np_ - n), (0, np_ - n)))
    w = weights.astype(jnp.float32).reshape(c)
    grid = (np_ // t, np_ // t)

    combined, rowsum = pl.pallas_call(
        functools.partial(_combine_kernel, n_ch=c),
        out_shape=(jax.ShapeDtypeStruct((np_, np_), jnp.float32),
                   jax.ShapeDtypeStruct((np_, 128), jnp.float32)),
        grid_spec=pltpu.PrefetchScalarGridSpec(
            num_scalar_prefetch=0,
            grid=grid,
            in_specs=[pl.BlockSpec(memory_space=pltpu.MemorySpace.SMEM),
                      pl.BlockSpec((c, t, t), lambda i, j: (0, i, j))],
            out_specs=(pl.BlockSpec((t, t), lambda i, j: (i, j)),
                       pl.BlockSpec((t, 128), lambda i, j: (i, 0))),
            scratch_shapes=[pltpu.VMEM((t, 128), jnp.float32)]),
        compiler_params=pltpu.CompilerParams(
            dimension_semantics=("parallel", "arbitrary"),
            vmem_limit_bytes=_CFG["vmem_limit"]),
    )(w, stack_p)
    return combined[:n, :n], rowsum[:n, 0]


# ----------------------------------------------------------------------------- contrastive sim reduce
def _sim_reduce_kernel(a_ref, b_ref, pos_ref, sum_ref, psum_ref, acc_s, acc_p, *, inv_tau):
    j = pl.program_id(1)

    @pl.when(j == 0)
    def _():
        acc_s[...] = jnp.zeros_like(acc_s)
        acc_p[...] = jnp.zeros_like(acc_p)

    # cos-sim block via dot_general contracting last dims (a @ b.T, no explicit transpose).
    s = jax.lax.dot_general(a_ref[...], b_ref[...],
                            dimension_numbers=(((1,), (1,)), ((), ())),
                            preferred_element_type=jnp.float32)
    e = jnp.exp(s * inv_tau)                               # EUP; 1/tau pre-folded
    acc_s[...] += jnp.sum(e, axis=-1, keepdims=True)
    acc_p[...] += jnp.sum(e * pos_ref[...], axis=-1, keepdims=True)

    @pl.when(j == pl.num_programs(1) - 1)
    def _():
        sum_ref[...] = acc_s[...]
        psum_ref[...] = acc_p[...]


def pallas_sim_reduce(a, b, pos, tau):
    """Row-wise sum_j exp(cos(a_i, b_j)/tau) and sum_j exp(.)*pos[i,j]; the exp-sim
    matrix never leaves VMEM.  a, b must be row-normalised (M, D) / (N, D)."""
    m, d = a.shape
    n = b.shape[0]
    tm = min(_CFG["tm"], _round_up(m, 8))
    tn = min(_CFG["tn"], _round_up(n, 128))
    dp = _round_up(d, 128)
    ap = _pad2(a.astype(jnp.float32), tm, dp)
    bp = _pad2(b.astype(jnp.float32), tn, dp)
    posp = _pad2(pos.astype(jnp.float32), tm, tn)
    mp, np_ = ap.shape[0], bp.shape[0]
    grid = (mp // tm, np_ // tn)

    sums, psums = pl.pallas_call(
        functools.partial(_sim_reduce_kernel, inv_tau=float(1.0 / tau)),
        out_shape=(jax.ShapeDtypeStruct((mp, 128), jnp.float32),
                   jax.ShapeDtypeStruct((mp, 128), jnp.float32)),
        grid_spec=pltpu.PrefetchScalarGridSpec(
            num_scalar_prefetch=0,
            grid=grid,
            in_specs=[pl.BlockSpec((tm, dp), lambda i, j: (i, 0)),
                      pl.BlockSpec((tn, dp), lambda i, j: (j, 0)),
                      pl.BlockSpec((tm, tn), lambda i, j: (i, j))],
            out_specs=(pl.BlockSpec((tm, 128), lambda i, j: (i, 0)),
                       pl.BlockSpec((tm, 128), lambda i, j: (i, 0))),
            scratch_shapes=[pltpu.VMEM((tm, 128), jnp.float32),
                            pltpu.VMEM((tm, 128), jnp.float32)]),
        compiler_params=pltpu.CompilerParams(
            dimension_semantics=("parallel", "arbitrary"),
            vmem_limit_bytes=_CFG["vmem_limit"]),
    )(ap, bp, posp)
    # each zero-padded column of b contributes exactly exp(0)=1 to the plain row sum
    rowsum = sums[:m, 0] - float(np_ - n)
    rowsum_pos = psums[:m, 0]
    return rowsum, rowsum_pos


# ----------------------------------------------------------------------------- params
def _xavier_normal(key, shape, gain=1.0):
    fan_in, fan_out = shape
    std = gain * (2.0 / (fan_in + fan_out)) ** 0.5
    return std * jax.random.normal(key, shape, jnp.float32)


def init_params(key, input_dims, hidden, num_classes,
                len_sub_graph, len_homo_graph, len_relation_graph):
    keys = iter(jax.random.split(key, 64))
    p = {}
    p["fc_list"] = [(_xavier_normal(next(keys), (m, hidden), gain=1.414),
                     jnp.zeros((hidden,), jnp.float32)) for m in input_dims]
    p["hyper_gcn"] = [(_xavier_normal(next(keys), (hidden, hidden)),
                       jnp.zeros((hidden,), jnp.float32)) for _ in range(len_sub_graph)]
    p["concat_hp"] = (_xavier_normal(next(keys), (len_sub_graph * hidden, hidden)),
                      jnp.zeros((hidden,), jnp.float32))
    p["classifier"] = (_xavier_normal(next(keys), (hidden, num_classes)),
                       jnp.zeros((num_classes,), jnp.float32))
    p["gcn_meta_path"] = (_xavier_normal(next(keys), (hidden, hidden)),
                          jnp.zeros((hidden,), jnp.float32))
    p["gcn_relation"] = (_xavier_normal(next(keys), (hidden, hidden)),
                         jnp.zeros((hidden,), jnp.float32))
    p["sem_att"] = (_xavier_normal(next(keys), (hidden, hidden)),
                    jnp.zeros((hidden,), jnp.float32),
                    _xavier_normal(next(keys), (hidden, 1)))
    p["contrast"] = (_xavier_normal(next(keys), (hidden, hidden)),
                     jnp.zeros((hidden,), jnp.float32),
                     _xavier_normal(next(keys), (hidden, hidden)),
                     jnp.zeros((hidden,), jnp.float32))
    p["fast_sg_w"] = 0.1 * jax.random.normal(next(keys), (1, len_homo_graph), jnp.float32)
    p["fast_re_w"] = 0.1 * jax.random.normal(next(keys), (1, len_relation_graph), jnp.float32)
    # hyper_gcn1 / hyper_gcn_homo / concat / concat_g are unused in forward -> omitted.
    return p


# ----------------------------------------------------------------------------- sub-modules (dense)
def graph_conv(adj, deg, x, wb):
    """Dense GraphConv  D^-1/2 A D^-1/2 X W + b  with the normalisation fused into the
    tiled A@X kernel (column scale folded into X, row scale applied in-kernel); the
    normalised adjacency is never materialised."""
    w, b = wb
    dinv = jax.lax.rsqrt(jnp.maximum(deg, 1e-12))[:, None]     # (N, 1)
    ax = fused_matmul(adj, x * dinv, row_scale=dinv)
    return fused_matmul(ax, w, bias=b)


def semantic_attention(z, p):
    """HAN-style semantic attention over stacked meta-path embeddings z:(N,P,D)."""
    w1, b1, q = p
    n, npath, d = z.shape
    proj = pallas_linear(z.reshape(n * npath, d), w1, b1, act="tanh")
    scores = fused_matmul(proj, q).reshape(n, npath)            # (N, P)
    beta = jax.nn.softmax(jnp.mean(scores, axis=0))             # (P,)
    return jnp.einsum("p,npd->nd", beta, z)


def contrast_loss(z_mp, z_sc, pos, p, tau=0.9, lam=0.5):
    w1, b1, w2, b2 = p
    n = z_mp.shape[0]
    # batch both projections through one Linear-ELU-Linear pass (fused epilogues)
    z = jnp.concatenate([z_mp, z_sc], axis=0)
    zp = pallas_linear(pallas_linear(z, w1, b1, act="elu"), w2, b2)
    zp = zp * jax.lax.rsqrt(jnp.sum(zp * zp, axis=-1, keepdims=True) + 1e-8)
    zp_mp, zp_sc = zp[:n], zp[n:]

    rs_mp, rp_mp = pallas_sim_reduce(zp_mp, zp_sc, pos, tau)      # mp -> sc direction
    rs_sc, rp_sc = pallas_sim_reduce(zp_sc, zp_mp, pos.T, tau)    # sc -> mp (== sim.T)
    lori_mp = -jnp.mean(jnp.log(rp_mp / (rs_mp + 1e-8) + 1e-12))
    lori_sc = -jnp.mean(jnp.log(rp_sc / (rs_sc + 1e-8) + 1e-12))
    return lam * lori_mp + (1.0 - lam) * lori_sc


def dataset_node_counts(dataset):
    table = {"ACM_L": (4019, 11246), "IMDB": (4278, 11616), "DBLP": (4057, 26128),
             "YELP": (2614, 3913), "MAG": (4017, 0), "FreeBase": (3492, 0)}
    if dataset not in table:
        raise Exception("no such dataset!")
    return table[dataset]


# ----------------------------------------------------------------------------- HGFS forward
def hgfs_forward(params, features_list, sub_graph, homo_graph, hp_G, type_mask,
                 hidden_dim, dataset="ACM_L", num_override=None):
    if num_override is not None:
        num, num1 = num_override
    else:
        num, num1 = dataset_node_counts(dataset)

    # --- FastGTConv over semantic (meta-path) candidate graphs -----------------
    att_meta = jax.nn.softmax(params["fast_sg_w"], axis=1)          # (1, C_sg)
    s_g, s_deg = pallas_combine(att_meta[0], hp_G[0])
    semantic_graph = [s_g]

    # --- FastGTConv over relation candidate graphs -----------------------------
    att_relation = jax.nn.softmax(params["fast_re_w"], axis=1)
    r_g, r_deg = pallas_combine(att_relation[0], hp_G[1])
    relation_graph = [r_g]
    # TODO(synk): original builds torch.sparse COO -> coalesce -> scipy -> DGL graphs
    # here (with a rows==cols indexing quirk); dense adjacency is used instead.

    # --- per-type feature projection -> h (tanh fused into the linear kernel) ---
    # type_mask is contiguous by type for these datasets, so a static concatenation
    # replaces the nonzero + scatter of the reference.
    # TODO(synk): a non-contiguous type_mask would need a gather/scatter path.
    parts = [pallas_linear(features_list[i], w, b, act="tanh")
             for i, (w, b) in enumerate(params["fc_list"])]
    h = jnp.concatenate(parts, axis=0)                              # (num1, D)
    # dropout / drop_feat are identity in deterministic (eval) mode.

    # --- hypergraph convolutions over sub_graphs --------------------------------
    embs = []
    for i, (g_dense, num_v) in enumerate(sub_graph):
        w, b = params["hyper_gcn"][i]
        x = pallas_linear(h[:num_v], w, b)                          # theta(X)
        x = fused_matmul(g_dense, x, act="relu")                    # smoothing + relu
        embs.append(x[:num])
    embeddings = jnp.concatenate(embs, axis=1)
    embedding = pallas_linear(embeddings, *params["concat_hp"], act="tanh")

    embedding_all = jnp.concatenate([embedding, h[num:]], axis=0)   # (num1, D)

    emb_relation = graph_conv(r_g, r_deg, embedding_all, params["gcn_relation"])[:num]
    emb_meta_path = graph_conv(s_g, s_deg, embedding, params["gcn_meta_path"])

    emb_stack = jnp.stack([emb_relation, emb_meta_path], axis=1)    # (num, 2, D)
    emb = semantic_attention(emb_stack, params["sem_att"])
    logits = pallas_linear(emb, *params["classifier"])
    loss = contrast_loss(emb_relation, emb_meta_path, homo_graph, params["contrast"],
                         tau=0.9, lam=0.5)
    return emb, logits, loss, relation_graph, semantic_graph, att_meta, att_relation


# ----------------------------------------------------------------------------- main
if __name__ == "__main__":
    key = jax.random.PRNGKey(0)
    k_par, k_f0, k_f1, k_f2, k_sg, k_rg, k_g0, k_g1, k_pos = jax.random.split(key, 9)

    # --- sanity-check the K-accumulating matmul path once (loose bf16 tolerance) ---
    ka, kb = jax.random.split(jax.random.PRNGKey(1))
    k_big = 2 * _CFG["tk"]                      # guarantees grid_k >= 2 on every config
    aa = jax.random.normal(ka, (256, k_big), jnp.float32)
    bb = jax.random.normal(kb, (k_big, 256), jnp.float32)
    out_acc = fused_matmul(aa, bb)
    ref_acc = aa @ bb
    rel_err = jnp.max(jnp.abs(out_acc - ref_acc)) / jnp.maximum(jnp.max(jnp.abs(ref_acc)), 1.0)
    assert float(rel_err) < 2e-2, float(rel_err)

    # small synthetic shapes
    hidden_dim = 32
    num_classes = 3
    num, num1 = 16, 40                      # target nodes / total nodes
    input_dims = [6, 5, 7]                  # three node types
    counts = [16, 12, 12]                   # nodes per type (sum == num1)
    len_sub_graph, len_homo_graph, len_relation_graph = 2, 2, 3

    type_mask = jnp.concatenate(
        [jnp.full((c,), i, jnp.int32) for i, c in enumerate(counts)])

    features_list = [
        jax.random.normal(k_f0, (counts[0], input_dims[0]), jnp.float32),
        jax.random.normal(k_f1, (counts[1], input_dims[1]), jnp.float32),
        jax.random.normal(k_f2, (counts[2], input_dims[2]), jnp.float32),
    ]

    # hypergraph propagation matrices (row-normalised, mimicking mean v2v aggregation)
    def make_prop(k, n):
        a = jnp.abs(jax.random.normal(k, (n, n), jnp.float32))
        a = a + jnp.eye(n, dtype=jnp.float32)
        return a / jnp.sum(a, axis=1, keepdims=True)

    sub_graph = [(make_prop(k_g0, 28), 28), (make_prop(k_g1, num1), num1)]

    # candidate dense adjacencies for the two FastGTConv layers
    sg_stack = jnp.abs(jax.random.normal(k_sg, (len_homo_graph, num, num), jnp.float32))
    rg_stack = jnp.abs(jax.random.normal(k_rg, (len_relation_graph, num1, num1), jnp.float32))
    hp_G = [sg_stack, rg_stack]

    # positive-pair mask for the contrastive loss
    pos_rand = (jax.random.uniform(k_pos, (num, num)) > 0.8).astype(jnp.float32)
    homo_graph = jnp.clip(pos_rand + pos_rand.T + jnp.eye(num, dtype=jnp.float32), 0.0, 1.0)

    params = init_params(k_par, input_dims, hidden_dim, num_classes,
                         len_sub_graph, len_homo_graph, len_relation_graph)

    outs = hgfs_forward(params, features_list, sub_graph, homo_graph, hp_G, type_mask,
                        hidden_dim, dataset="ACM_L", num_override=(num, num1))
    emb, logits, loss = outs[0], outs[1], outs[2]
    jax.block_until_ready((emb, logits, loss))

    assert emb.shape == (num, hidden_dim)
    assert logits.shape == (num, num_classes)
    assert loss.shape == ()
    assert bool(jnp.isfinite(loss))
    assert bool(jnp.all(jnp.isfinite(logits)))
    print("KERNEL_OK")
</pallas_src>

<mosaic_0001>
module attributes {stable_mosaic.version = 11 : i64} {
  func.func @_mm_kernel_acc(%arg0: i32, %arg1: i32, %arg2: i32, %arg3: memref<256x512xf32, #tpu.memory_space<vmem>>, %arg4: memref<512x256xf32, #tpu.memory_space<vmem>>, %arg5: memref<256x256xf32, #tpu.memory_space<vmem>>, %arg6: memref<256x256xf32, #tpu.memory_space<vmem>>) attributes {dimension_semantics = [#tpu.dimension_semantics<parallel>, #tpu.dimension_semantics<parallel>, #tpu.dimension_semantics<arbitrary>], iteration_bounds = array<i64: 1, 1, 2>, scalar_prefetch = 0 : i64, scratch_operands = 1 : i64, tpu.core_type = #tpu.core_type<tc>, window_params = [{transform_indices = @transform_0, window_bounds = array<i64: 256, 512>}, {transform_indices = @transform_1, window_bounds = array<i64: 512, 256>}, {transform_indices = @transform_2, window_bounds = array<i64: 256, 256>}]} {
    %c0_i32 = arith.constant 0 : i32
    %0 = arith.cmpi eq, %arg2, %c0_i32 : i32
    %1 = arith.extui %0 : i1 to i32
    %c0_i32_0 = arith.constant 0 : i32
    %2 = arith.cmpi ne, %1, %c0_i32_0 : i32
    scf.if %2 {
      %cst_9 = arith.constant 0.000000e+00 : f32
      %14 = vector.broadcast %cst_9 : f32 to vector<256x256xf32>
      %c0_10 = arith.constant 0 : index
      %c0_11 = arith.constant 0 : index
      %15 = vector.load %arg6[%c0_10, %c0_11] : memref<256x256xf32, #tpu.memory_space<vmem>>, vector<256x256xf32>
      tpu.vector_store %arg6[%c0_10, %c0_11], %14 {strides = array<i32>} : memref<256x256xf32, #tpu.memory_space<vmem>>, vector<256x256xf32>,
    } else {
    }
    %c0 = arith.constant 0 : index
    %c0_1 = arith.constant 0 : index
    %3 = vector.load %arg6[%c0, %c0_1] : memref<256x256xf32, #tpu.memory_space<vmem>>, vector<256x256xf32>
    %c0_2 = arith.constant 0 : index
    %c0_3 = arith.constant 0 : index
    %4 = vector.load %arg3[%c0_2, %c0_3] : memref<256x512xf32, #tpu.memory_space<vmem>>, vector<256x512xf32>
    %5 = arith.truncf %4 : vector<256x512xf32> to vector<256x512xbf16>
    %c0_4 = arith.constant 0 : index
    %c0_5 = arith.constant 0 : index
    %6 = vector.load %arg4[%c0_4, %c0_5] : memref<512x256xf32, #tpu.memory_space<vmem>>, vector<512x256xf32>
    %7 = arith.truncf %6 : vector<512x256xf32> to vector<512x256xbf16>
    %cst = arith.constant dense<0.000000e+00> : vector<256x256xf32>
    %8 = tpu.matmul %5, %7, %cst {dimension_numbers = #tpu.dot_dimension_numbers<[1], [0], [0], [1], [0, 0, 1, 1], [], []>} : vector<256x512xbf16>, vector<512x256xbf16>, vector<256x256xf32> -> vector<256x256xf32>
    %9 = arith.addf %3, %8 : vector<256x256xf32>
    %c0_6 = arith.constant 0 : index
    %c0_7 = arith.constant 0 : index
    %10 = vector.load %arg6[%c0_6, %c0_7] : memref<256x256xf32, #tpu.memory_space<vmem>>, vector<256x256xf32>
    tpu.vector_store %arg6[%c0_6, %c0_7], %9 {strides = array<i32>} : memref<256x256xf32, #tpu.memory_space<vmem>>, vector<256x256xf32>,
    %c1_i32 = arith.constant 1 : i32
    %11 = arith.cmpi eq, %arg2, %c1_i32 : i32
    %12 = arith.extui %11 : i1 to i32
    %c0_i32_8 = arith.constant 0 : i32
    %13 = arith.cmpi ne, %12, %c0_i32_8 : i32
    scf.if %13 {
      %c0_9 = arith.constant 0 : index
      %c0_10 = arith.constant 0 : index
      %14 = vector.load %arg6[%c0_9, %c0_10] : memref<256x256xf32, #tpu.memory_space<vmem>>, vector<256x256xf32>
      %c0_11 = arith.constant 0 : index
      %c0_12 = arith.constant 0 : index
      %15 = vector.load %arg5[%c0_11, %c0_12] : memref<256x256xf32, #tpu.memory_space<vmem>>, vector<256x256xf32>
      tpu.vector_store %arg5[%c0_11, %c0_12], %14 {strides = array<i32>} : memref<256x256xf32, #tpu.memory_space<vmem>>, vector<256x256xf32>,
    } else {
    }
    return
  }
  func.func @transform_0(%arg0: i32, %arg1: i32, %arg2: i32) -> (i32, i32) {
    %c0_i32 = arith.constant 0 : i32
    return %arg0, %arg2 : i32, i32
  }
  func.func @transform_1(%arg0: i32, %arg1: i32, %arg2: i32) -> (i32, i32) {
    %c0_i32 = arith.constant 0 : i32
    return %arg2, %arg1 : i32, i32
  }
  func.func @transform_2(%arg0: i32, %arg1: i32, %arg2: i32) -> (i32, i32) {
    %c0_i32 = arith.constant 0 : i32
    return %arg0, %arg1 : i32, i32
  }
}

</mosaic_0001>

<llo_original>
// kernel: tpu_custom_call.1
$region0: #{tpu_custom_call.1}
  #allocation0 [shape = 'u32[]', space=smem, size = 0x4, offset = 0x4, fixed_abs, tag = 'smem constant byte address 0x4 - core index']
  #allocation1 [shape = 'u32[144,128]{1,0:T(1,128)}', space=vmem, size = 0x12000, scoped, tag = 'internal scratch']
  #allocation2 [shape = 'f32[256,256]{1,0:T(8,128)}', space=vmem, size = 0x40000, scoped, tag = 'scratch operand']
  %s0 = inlined_call_operand.hbm [shape: f32[256,1024], index: 0, kind: input, shape index: {}]
  %s1 = inlined_call_operand.hbm [shape: f32[1024,256], index: 1, kind: input, shape index: {}]
  %s2 = inlined_call_operand.hbm [shape: f32[256,256], index: 2, kind: output, shape index: {}]
  %s3 = sld [smem:[#allocation0]]
  $region57: #{tpu_custom_call.1} parent=0
    _
  %s5 = ssub.s32 1, %s3
  %s6 = scalar_select 0, %s5, %s3
  $region1: #{tpu_custom_call.1} parent=0
    #allocation3 [shape = 'u8[1048576]{0}', space=vmem, size = 0x100000, scoped, tag = 'input window, operand 0']
    #allocation4 [shape = 's32[2]{0}', space=sflag, size = 0x8, scoped, tag = 'scoped memory for tpu_custom_call.1']
    #allocation5 [shape = 's32[2]{0}', space=sflag, size = 0x8, scoped, tag = 'scoped memory for tpu_custom_call.1']
    #allocation6 [shape = 'u8[1048576]{0}', space=vmem, size = 0x100000, scoped, tag = 'input window, operand 1']
    #allocation7 [shape = 's32[2]{0}', space=sflag, size = 0x8, scoped, tag = 'scoped memory for tpu_custom_call.1']
    #allocation8 [shape = 'u8[262144]{0}', space=vmem, size = 0x40000, scoped, tag = 'output window, operand 0, single buffered']
    %7 = vsyncpa [#allocation4], 0
    %s8 = scalar_lea.sflag [#allocation4], 1
    %9 = vsyncpa %s8, 0
    %10 = vsyncpa [#allocation7], 0
    %s11 = scalar_lea.sflag [#allocation7], 1
    %12 = vsyncpa %s11, 0
    %13 = vsyncpa [#allocation5], 0
    loop: start=0, step=1, limit=4
    $region2: #{tpu_custom_call.1} parent=1 // loop_pre_header
      _
    $region3: #{tpu_custom_call.1} parent=1 // loop_header
      %s15 = sphi 0, %s19
      %p16 = scmp.ge.s32.totalorder %s15, 4
      %s22 = sphi 0, %s41
      %s23 = sphi 0, %s37
      %s24 = sphi 0, %s33
      %s25 = sphi 0, %s22
      %s26 = sphi 0, %s23
      %s27 = sphi 0, %s24
      %s28 = sphi 0, %s25
      %s29 = sphi 0, %s26
      %s30 = sphi 0, %s27
      %s46 = sphi 0, %s48
      %s49 = sphi 0, %s46
      %s50 = sphi 0, %s49
      %s66 = sphi 0, %s50
      %s74 = sphi 0, %s76
      %s77 = sphi 0, %s74
      %s78 = sphi 0, %s77
      %s94 = sphi 0, %s78
      %s102 = sphi 0, %s104
      %s105 = sphi 0, %s102
      %s106 = sphi 0, %s105
      %s122 = sphi 0, %s106
    $region4: #{tpu_custom_call.1} parent=1 // loop_header_branch
      %18 = sbr.rel (%p16) target = $region8
    $region5: #{tpu_custom_call.1} parent=1 // loop_body
      %s20 = ssub.s32 %s15, 1
      %s21 = ssub.s32 %s15, 2
      %s31 = sadd.s32 1, %s24
      %p32 = scmp.ge.s32.totalorder %s31, 2
      %s33 = scalar_select %p32, 0, %s31
      %s34 = sadd.s32 1, %s23
      %s35 = scalar_select %p32, %s34, %s23
      %p36 = scmp.ge.s32.totalorder %s35, 1
      %s37 = scalar_select %p36, 0, %s35
      %s38 = sadd.s32 1, %s22
      %s39 = scalar_select %p36, %s38, %s22
      %p40 = scmp.ge.s32.totalorder %s39, 1
      %s41 = scalar_select %p40, 0, %s39
      %s42 = ssub.s32 %s22, %s41
      %s43 = ssub.s32 %s24, %s33
      %s44 = sor.u32 %s42, %s43
      %p45 = scmp.eq.s32.totalorder %s44, 0
      %s47 = sadd.s32 %s46, 1
      %s48 = scalar_select %p45, %s46, %s47
      %p51 = pneg %p45
      %p52 = scmp.eq.s32.totalorder %s15, 1
      %p53 = por %p51, %p52
      %p54 = scmp.ne.s32.totalorder %s46, %s49
      %p55 = scmp.eq.s32.totalorder %s15, 0
      %p56 = por %p54, %p55
      %p57 = scmp.ne.s32.totalorder %s46, %s49
      %p58 = scmp.eq.s32.totalorder %s20, 1
      %p59 = por %p57, %p58
      %p60 = scmp.ne.s32.totalorder %s49, %s50
      %p61 = scmp.eq.s32.totalorder %s20, 0
      %p62 = por %p60, %p61
      %p63 = scmp.ne.s32.totalorder %s49, %s50
      %p64 = scmp.eq.s32.totalorder %s21, 1
      %p65 = por %p63, %p64
      %p67 = scmp.ne.s32.totalorder %s50, %s66
      %p68 = scmp.eq.s32.totalorder %s21, 0
      %p69 = por %p67, %p68
      %s70 = ssub.s32 %s24, %s33
      %s71 = ssub.s32 %s23, %s37
      %s72 = sor.u32 %s70, %s71
      %p73 = scmp.eq.s32.totalorder %s72, 0
      %s75 = sadd.s32 %s74, 1
      %s76 = scalar_select %p73, %s74, %s75
      %p79 = pneg %p73
      %p80 = scmp.eq.s32.totalorder %s15, 1
      %p81 = por %p79, %p80
      %p82 = scmp.ne.s32.totalorder %s74, %s77
      %p83 = scmp.eq.s32.totalorder %s15, 0
      %p84 = por %p82, %p83
      %p85 = scmp.ne.s32.totalorder %s74, %s77
      %p86 = scmp.eq.s32.totalorder %s20, 1
      %p87 = por %p85, %p86
      %p88 = scmp.ne.s32.totalorder %s77, %s78
      %p89 = scmp.eq.s32.totalorder %s20, 0
      %p90 = por %p88, %p89
      %p91 = scmp.ne.s32.totalorder %s77, %s78
      %p92 = scmp.eq.s32.totalorder %s21, 1
      %p93 = por %p91, %p92
      %p95 = scmp.ne.s32.totalorder %s78, %s94
      %p96 = scmp.eq.s32.totalorder %s21, 0
      %p97 = por %p95, %p96
      %s98 = ssub.s32 %s22, %s41
      %s99 = ssub.s32 %s23, %s37
      %s100 = sor.u32 %s98, %s99
      %p101 = scmp.eq.s32.totalorder %s100, 0
      %s103 = sadd.s32 %s102, 1
      %s104 = scalar_select %p101, %s102, %s103
      %p107 = pneg %p101
      %p108 = scmp.eq.s32.totalorder %s15, 1
      %p109 = por %p107, %p108
      %p110 = scmp.ne.s32.totalorder %s102, %s105
      %p111 = scmp.eq.s32.totalorder %s15, 0
      %p112 = por %p110, %p111
      %p113 = scmp.ne.s32.totalorder %s102, %s105
      %p114 = scmp.eq.s32.totalorder %s20, 1
      %p115 = por %p113, %p114
      %p116 = scmp.ne.s32.totalorder %s105, %s106
      %p117 = scmp.eq.s32.totalorder %s20, 0
      %p118 = por %p116, %p117
      %p119 = scmp.ne.s32.totalorder %s105, %s106
      %p120 = scmp.eq.s32.totalorder %s21, 1
      %p121 = por %p119, %p120
      %p123 = scmp.ne.s32.totalorder %s106, %s122
      %p124 = scmp.eq.s32.totalorder %s21, 0
      %p125 = por %p123, %p124
      %p126 = scmp.le.s32.totalorder 1, %s15
      %p127 = scmp.lt.s32.totalorder %s15, 3
      %p128 = pnand %p126, %p127
      %p129 = pneg %p128
      // Predicated region
      $region9: #{tpu_custom_call.1} parent=5 // pred_check
        _
      $region10: #{tpu_custom_call.1} parent=5 // pred_check_branch
        %131 = sbr.rel (%p128) target = $region12
      $region11: #{tpu_custom_call.1} parent=5 // pred_region
        %s132 = ssub.s32 %s15, 1
      $region12: #{tpu_custom_call.1} parent=5 // pred_fallthru
        _
      %p133 = scmp.lt.s32.totalorder %s15, 2
      // Predicated region
      $region13: #{tpu_custom_call.1} parent=5 // pred_check
        %p134 = pneg %p133
      $region14: #{tpu_custom_call.1} parent=5 // pred_check_branch
        %136 = sbr.rel (%p134) target = $region16
      $region15: #{tpu_custom_call.1} parent=5 // pred_region
        // Predicated region
        $region17: #{tpu_custom_call.1} parent=15 // pred_check
          %p137 = pneg %p56
        $region18: #{tpu_custom_call.1} parent=15 // pred_check_branch
          %139 = sbr.rel (%p137) target = $region20
        $region19: #{tpu_custom_call.1} parent=15 // pred_region
          %s140 = sand.u32 %s46, 1
          %s141 = scalar_lea.sflag [#allocation4], %s140
          %s142 = sand.u32 %s46, 1
          %s143 = smul.addr %s142, 1024
          %s144 = scalar_lea.vmem [#allocation3], %s143
          %s145 = smul.u32 32, %s22
          %s146 = smul.u32 4, %s24
          %s148 = ssub.s32 16384, 16384
          %149 = vsyncadd %s141, %s148
          %s150 = smul.addr %s145, 8
          %s151 = sadd.s32 %s146, %s150
          %s152 = smul.addr %s151, 128
          %s153 = scalar_lea.hbm %s0, %s152
          %s154 = sshll.u32 %s144, 4
          %s155 = int_to_ptr.vmem [resolvable:$true] %s154
          %160 = dma.hbm_to_vmem [thread:$0]  %s153, 16384, %s155, %s141, 1024, 512, 32
        $region20: #{tpu_custom_call.1} parent=15 // pred_fallthru
          _
        // Predicated region
        $region21: #{tpu_custom_call.1} parent=15 // pred_check
          %p161 = pneg %p84
        $region22: #{tpu_custom_call.1} parent=15 // pred_check_branch
          %163 = sbr.rel (%p161) target = $region24
        $region23: #{tpu_custom_call.1} parent=15 // pred_region
          %s164 = sand.u32 %s74, 1
          %s165 = scalar_lea.sflag [#allocation7], %s164
          %s166 = sand.u32 %s74, 1
          %s167 = smul.addr %s166, 1024
          %s168 = scalar_lea.vmem [#allocation6], %s167
          %s169 = smul.u32 64, %s24
          %s170 = smul.u32 2, %s23
          %s172 = ssub.s32 16384, 16384
          %173 = vsyncadd %s165, %s172
          %s174 = smul.addr %s169, 2
          %s175 = sadd.s32 %s170, %s174
          %s176 = smul.addr %s175, 128
          %s177 = scalar_lea.hbm %s1, %s176
          %s178 = sshll.u32 %s168, 4
          %s179 = int_to_ptr.vmem [resolvable:$true] %s178
          %184 = dma.hbm_to_vmem [thread:$0]  %s177, 16384, %s179, %s165, 256, 256, 16
        $region24: #{tpu_custom_call.1} parent=15 // pred_fallthru
          _
      $region16: #{tpu_custom_call.1} parent=5 // pred_fallthru
        _
      %p185 = scmp.le.s32.totalorder 1, %s15
      %p186 = scmp.lt.s32.totalorder %s15, 3
      %p187 = pnand %p185, %p186
      %p188 = pneg %p187
      // Predicated region
      $region25: #{tpu_custom_call.1} parent=5 // pred_check
        _
      $region26: #{tpu_custom_call.1} parent=5 // pred_check_branch
        %190 = sbr.rel (%p187) target = $region28
      $region27: #{tpu_custom_call.1} parent=5 // pred_region
        %s191 = ssub.s32 %s15, 1
        %s192 = sand.u32 %s49, 1
        %s193 = scalar_lea.sflag [#allocation4], %s192
        %s194 = sand.u32 %s49, 1
        %s195 = smul.addr %s194, 1024
        %s196 = scalar_lea.vmem [#allocation3], %s195
        // Predicated region
        $region29: #{tpu_custom_call.1} parent=27 // pred_check
          %p197 = pneg %p62
        $region30: #{tpu_custom_call.1} parent=27 // pred_check_branch
          %199 = sbr.rel (%p197) target = $region32
        $region31: #{tpu_custom_call.1} parent=27 // pred_region
          %200 = dma.done %s193, 16384
        $region32: #{tpu_custom_call.1} parent=27 // pred_fallthru
          _
        %s201 = sand.u32 %s77, 1
        %s202 = scalar_lea.sflag [#allocation7], %s201
        %s203 = sand.u32 %s77, 1
        %s204 = smul.addr %s203, 1024
        %s205 = scalar_lea.vmem [#allocation6], %s204
        // Predicated region
        $region33: #{tpu_custom_call.1} parent=27 // pred_check
          %p206 = pneg %p90
        $region34: #{tpu_custom_call.1} parent=27 // pred_check_branch
          %208 = sbr.rel (%p206) target = $region36
        $region35: #{tpu_custom_call.1} parent=27 // pred_region
          %209 = dma.done %s202, 16384
        $region36: #{tpu_custom_call.1} parent=27 // pred_fallthru
          _
        %s210 = sand.u32 %s49, 1
        %s211 = scalar_lea.sflag [#allocation4], %s210
        %s212 = sand.u32 %s49, 1
        %s213 = smul.addr %s212, 1024
        %s214 = scalar_lea.vmem [#allocation3], %s213
        %p215 = pneg %p62
        %p216 = pneg %p59
        %s217 = sand.u32 %s77, 1
        %s218 = scalar_lea.sflag [#allocation7], %s217
        %s219 = sand.u32 %s77, 1
        %s220 = smul.addr %s219, 1024
        %s221 = scalar_lea.vmem [#allocation6], %s220
        %p222 = pneg %p90
        %p223 = pneg %p87
        %p224 = pneg %p118
        %p225 = pneg %p115
        %s226 = smul.u32 32, %s25
        %s227 = smul.u32 4, %s27
        %s228 = smul.u32 64, %s27
        %s229 = smul.u32 2, %s26
        %s230 = smul.u32 32, %s25
        %s231 = smul.u32 2, %s26
        %p232 = scmp.eq.s32.totalorder %s27, 0
        // Predicated region
        $region37: #{tpu_custom_call.1} parent=27 // pred_check
          %p233 = pneg %p232
        $region38: #{tpu_custom_call.1} parent=27 // pred_check_branch
          %235 = sbr.rel (%p233) target = $region40
        $region39: #{tpu_custom_call.1} parent=27 // pred_region
          %236 = vst [vmem:[#allocation2] sm:$0xff] 0.0
          %237 = vst [vmem:[#allocation2 + $0x8] sm:$0xff] 0.0
          %238 = vst [vmem:[#allocation2 + $0x10] sm:$0xff] 0.0
          %239 = vst [vmem:[#allocation2 + $0x18] sm:$0xff] 0.0
          %240 = vst [vmem:[#allocation2 + $0x20] sm:$0xff] 0.0
          %241 = vst [vmem:[#allocation2 + $0x28] sm:$0xff] 0.0
          %242 = vst [vmem:[#allocation2 + $0x30] sm:$0xff] 0.0
          %243 = vst [vmem:[#allocation2 + $0x38] sm:$0xff] 0.0
          %244 = vst [vmem:[#allocation2 + $0x40] sm:$0xff] 0.0
          %245 = vst [vmem:[#allocation2 + $0x48] sm:$0xff] 0.0
          %246 = vst [vmem:[#allocation2 + $0x50] sm:$0xff] 0.0
          %247 = vst [vmem:[#allocation2 + $0x58] sm:$0xff] 0.0
          %248 = vst [vmem:[#allocation2 + $0x60] sm:$0xff] 0.0
          %249 = vst [vmem:[#allocation2 + $0x68] sm:$0xff] 0.0
          %250 = vst [vmem:[#allocation2 + $0x70] sm:$0xff] 0.0
          %251 = vst [vmem:[#allocation2 + $0x78] sm:$0xff] 0.0
          %252 = vst [vmem:[#allocation2 + $0x80] sm:$0xff] 0.0
          %253 = vst [vmem:[#allocation2 + $0x88] sm:$0xff] 0.0
          %254 = vst [vmem:[#allocation2 + $0x90] sm:$0xff] 0.0
          %255 = vst [vmem:[#allocation2 + $0x98] sm:$0xff] 0.0
          %256 = vst [vmem:[#allocation2 + $0xa0] sm:$0xff] 0.0
          %257 = vst [vmem:[#allocation2 + $0xa8] sm:$0xff] 0.0
          %258 = vst [vmem:[#allocation2 + $0xb0] sm:$0xff] 0.0
          %259 = vst [vmem:[#allocation2 + $0xb8] sm:$0xff] 0.0
          %260 = vst [vmem:[#allocation2 + $0xc0] sm:$0xff] 0.0
          %261 = vst [vmem:[#allocation2 + $0xc8] sm:$0xff] 0.0
          %262 = vst [vmem:[#allocation2 + $0xd0] sm:$0xff] 0.0
          %263 = vst [vmem:[#allocation2 + $0xd8] sm:$0xff] 0.0
          %264 = vst [vmem:[#allocation2 + $0xe0] sm:$0xff] 0.0
          %265 = vst [vmem:[#allocation2 + $0xe8] sm:$0xff] 0.0
          %266 = vst [vmem:[#allocation2 + $0xf0] sm:$0xff] 0.0
          %267 = vst [vmem:[#allocation2 + $0xf8] sm:$0xff] 0.0
          %268 = vst [vmem:[#allocation2 + $0x100] sm:$0xff] 0.0
          %269 = vst [vmem:[#allocation2 + $0x108] sm:$0xff] 0.0
          %270 = vst [vmem:[#allocation2 + $0x110] sm:$0xff] 0.0
          %271 = vst [vmem:[#allocation2 + $0x118] sm:$0xff] 0.0
          %272 = vst [vmem:[#allocation2 + $0x120] sm:$0xff] 0.0
          %273 = vst [vmem:[#allocation2 + $0x128] sm:$0xff] 0.0
          %274 = vst [vmem:[#allocation2 + $0x130] sm:$0xff] 0.0
          %275 = vst [vmem:[#allocation2 + $0x138] sm:$0xff] 0.0
          %276 = vst [vmem:[#allocation2 + $0x140] sm:$0xff] 0.0
          %277 = vst [vmem:[#allocation2 + $0x148] sm:$0xff] 0.0
          %278 = vst [vmem:[#allocation2 + $0x150] sm:$0xff] 0.0
          %279 = vst [vmem:[#allocation2 + $0x158] sm:$0xff] 0.0
          %280 = vst [vmem:[#allocation2 + $0x160] sm:$0xff] 0.0
          %281 = vst [vmem:[#allocation2 + $0x168] sm:$0xff] 0.0
          %282 = vst [vmem:[#allocation2 + $0x170] sm:$0xff] 0.0
          %283 = vst [vmem:[#allocation2 + $0x178] sm:$0xff] 0.0
          %284 = vst [vmem:[#allocation2 + $0x180] sm:$0xff] 0.0
          %285 = vst [vmem:[#allocation2 + $0x188] sm:$0xff] 0.0
          %286 = vst [vmem:[#allocation2 + $0x190] sm:$0xff] 0.0
          %287 = vst [vmem:[#allocation2 + $0x198] sm:$0xff] 0.0
          %288 = vst [vmem:[#allocation2 + $0x1a0] sm:$0xff] 0.0
          %289 = vst [vmem:[#allocation2 + $0x1a8] sm:$0xff] 0.0
          %290 = vst [vmem:[#allocation2 + $0x1b0] sm:$0xff] 0.0
          %291 = vst [vmem:[#allocation2 + $0x1b8] sm:$0xff] 0.0
          %292 = vst [vmem:[#allocation2 + $0x1c0] sm:$0xff] 0.0
          %293 = vst [vmem:[#allocation2 + $0x1c8] sm:$0xff] 0.0
          %294 = vst [vmem:[#allocation2 + $0x1d0] sm:$0xff] 0.0
          %295 = vst [vmem:[#allocation2 + $0x1d8] sm:$0xff] 0.0
          %296 = vst [vmem:[#allocation2 + $0x1e0] sm:$0xff] 0.0
          %297 = vst [vmem:[#allocation2 + $0x1e8] sm:$0xff] 0.0
          %298 = vst [vmem:[#allocation2 + $0x1f0] sm:$0xff] 0.0
          %299 = vst [vmem:[#allocation2 + $0x1f8] sm:$0xff] 0.0
        $region40: #{tpu_custom_call.1} parent=27 // pred_fallthru
          _
        %v300 = vld [vmem:[#allocation2] sm:$0xff]
        %v301 = vld [vmem:[#allocation2 + $0x8] sm:$0xff]
        %v302 = vld [vmem:[#allocation2 + $0x10] sm:$0xff]
        %v303 = vld [vmem:[#allocation2 + $0x18] sm:$0xff]
        %v304 = vld [vmem:[#allocation2 + $0x20] sm:$0xff]
        %v305 = vld [vmem:[#allocation2 + $0x28] sm:$0xff]
        %v306 = vld [vmem:[#allocation2 + $0x30] sm:$0xff]
        %v307 = vld [vmem:[#allocation2 + $0x38] sm:$0xff]
        %v308 = vld [vmem:[#allocation2 + $0x40] sm:$0xff]
        %v309 = vld [vmem:[#allocation2 + $0x48] sm:$0xff]
        %v310 = vld [vmem:[#allocation2 + $0x50] sm:$0xff]
        %v311 = vld [vmem:[#allocation2 + $0x58] sm:$0xff]
        %v312 = vld [vmem:[#allocation2 + $0x60] sm:$0xff]
        %v313 = vld [vmem:[#allocation2 + $0x68] sm:$0xff]
        %v314 = vld [vmem:[#allocation2 + $0x70] sm:$0xff]
        %v315 = vld [vmem:[#allocation2 + $0x78] sm:$0xff]
        %v316 = vld [vmem:[#allocation2 + $0x80] sm:$0xff]
        %v317 = vld [vmem:[#allocation2 + $0x88] sm:$0xff]
        %v318 = vld [vmem:[#allocation2 + $0x90] sm:$0xff]
        %v319 = vld [vmem:[#allocation2 + $0x98] sm:$0xff]
        %v320 = vld [vmem:[#allocation2 + $0xa0] sm:$0xff]
        %v321 = vld [vmem:[#allocation2 + $0xa8] sm:$0xff]
        %v322 = vld [vmem:[#allocation2 + $0xb0] sm:$0xff]
        %v323 = vld [vmem:[#allocation2 + $0xb8] sm:$0xff]
        %v324 = vld [vmem:[#allocation2 + $0xc0] sm:$0xff]
        %v325 = vld [vmem:[#allocation2 + $0xc8] sm:$0xff]
        %v326 = vld [vmem:[#allocation2 + $0xd0] sm:$0xff]
        %v327 = vld [vmem:[#allocation2 + $0xd8] sm:$0xff]
        %v328 = vld [vmem:[#allocation2 + $0xe0] sm:$0xff]
        %v329 = vld [vmem:[#allocation2 + $0xe8] sm:$0xff]
        %v330 = vld [vmem:[#allocation2 + $0xf0] sm:$0xff]
        %v331 = vld [vmem:[#allocation2 + $0xf8] sm:$0xff]
        %v332 = vld [vmem:[#allocation2 + $0x100] sm:$0xff]
        %v333 = vld [vmem:[#allocation2 + $0x108] sm:$0xff]
        %v334 = vld [vmem:[#allocation2 + $0x110] sm:$0xff]
        %v335 = vld [vmem:[#allocation2 + $0x118] sm:$0xff]
        %v336 = vld [vmem:[#allocation2 + $0x120] sm:$0xff]
        %v337 = vld [vmem:[#allocation2 + $0x128] sm:$0xff]
        %v338 = vld [vmem:[#allocation2 + $0x130] sm:$0xff]
        %v339 = vld [vmem:[#allocation2 + $0x138] sm:$0xff]
        %v340 = vld [vmem:[#allocation2 + $0x140] sm:$0xff]
        %v341 = vld [vmem:[#allocation2 + $0x148] sm:$0xff]
        %v342 = vld [vmem:[#allocation2 + $0x150] sm:$0xff]
        %v343 = vld [vmem:[#allocation2 + $0x158] sm:$0xff]
        %v344 = vld [vmem:[#allocation2 + $0x160] sm:$0xff]
        %v345 = vld [vmem:[#allocation2 + $0x168] sm:$0xff]
        %v346 = vld [vmem:[#allocation2 + $0x170] sm:$0xff]
        %v347 = vld [vmem:[#allocation2 + $0x178] sm:$0xff]
        %v348 = vld [vmem:[#allocation2 + $0x180] sm:$0xff]
        %v349 = vld [vmem:[#allocation2 + $0x188] sm:$0xff]
        %v350 = vld [vmem:[#allocation2 + $0x190] sm:$0xff]
        %v351 = vld [vmem:[#allocation2 + $0x198] sm:$0xff]
        %v352 = vld [vmem:[#allocation2 + $0x1a0] sm:$0xff]
        %v353 = vld [vmem:[#allocation2 + $0x1a8] sm:$0xff]
        %v354 = vld [vmem:[#allocation2 + $0x1b0] sm:$0xff]
        %v355 = vld [vmem:[#allocation2 + $0x1b8] sm:$0xff]
        %v356 = vld [vmem:[#allocation2 + $0x1c0] sm:$0xff]
        %v357 = vld [vmem:[#allocation2 + $0x1c8] sm:$0xff]
        %v358 = vld [vmem:[#allocation2 + $0x1d0] sm:$0xff]
        %v359 = vld [vmem:[#allocation2 + $0x1d8] sm:$0xff]
        %v360 = vld [vmem:[#allocation2 + $0x1e0] sm:$0xff]
        %v361 = vld [vmem:[#allocation2 + $0x1e8] sm:$0xff]
        %v362 = vld [vmem:[#allocation2 + $0x1f0] sm:$0xff]
        %v363 = vld [vmem:[#allocation2 + $0x1f8] sm:$0xff]
        %v364 = vld [vmem:[%s196] sm:$0xff]
        %v365 = vld [vmem:[%s196 + $0x8] sm:$0xff]
        %v366 = vld [vmem:[%s196 + $0x10] sm:$0xff]
        %v367 = vld [vmem:[%s196 + $0x18] sm:$0xff]
        %v368 = vld [vmem:[%s196 + $0x20] sm:$0xff]
        %v369 = vld [vmem:[%s196 + $0x28] sm:$0xff]
        %v370 = vld [vmem:[%s196 + $0x30] sm:$0xff]
        %v371 = vld [vmem:[%s196 + $0x38] sm:$0xff]
        %v372 = vld [vmem:[%s196 + $0x40] sm:$0xff]
        %v373 = vld [vmem:[%s196 + $0x48] sm:$0xff]
        %v374 = vld [vmem:[%s196 + $0x50] sm:$0xff]
        %v375 = vld [vmem:[%s196 + $0x58] sm:$0xff]
        %v376 = vld [vmem:[%s196 + $0x60] sm:$0xff]
        %v377 = vld [vmem:[%s196 + $0x68] sm:$0xff]
        %v378 = vld [vmem:[%s196 + $0x70] sm:$0xff]
        %v379 = vld [vmem:[%s196 + $0x78] sm:$0xff]
        %v380 = vld [vmem:[%s196 + $0x80] sm:$0xff]
        %v381 = vld [vmem:[%s196 + $0x88] sm:$0xff]
        %v382 = vld [vmem:[%s196 + $0x90] sm:$0xff]
        %v383 = vld [vmem:[%s196 + $0x98] sm:$0xff]
        %v384 = vld [vmem:[%s196 + $0xa0] sm:$0xff]
        %v385 = vld [vmem:[%s196 + $0xa8] sm:$0xff]
        %v386 = vld [vmem:[%s196 + $0xb0] sm:$0xff]
        %v387 = vld [vmem:[%s196 + $0xb8] sm:$0xff]
        %v388 = vld [vmem:[%s196 + $0xc0] sm:$0xff]
        %v389 = vld [vmem:[%s196 + $0xc8] sm:$0xff]
        %v390 = vld [vmem:[%s196 + $0xd0] sm:$0xff]
        %v391 = vld [vmem:[%s196 + $0xd8] sm:$0xff]
        %v392 = vld [vmem:[%s196 + $0xe0] sm:$0xff]
        %v393 = vld [vmem:[%s196 + $0xe8] sm:$0xff]
        %v394 = vld [vmem:[%s196 + $0xf0] sm:$0xff]
        %v395 = vld [vmem:[%s196 + $0xf8] sm:$0xff]
        %v396 = vld [vmem:[%s196 + $0x100] sm:$0xff]
        %v397 = vld [vmem:[%s196 + $0x108] sm:$0xff]
        %v398 = vld [vmem:[%s196 + $0x110] sm:$0xff]
        %v399 = vld [vmem:[%s196 + $0x118] sm:$0xff]
        %v400 = vld [vmem:[%s196 + $0x120] sm:$0xff]
        %v401 = vld [vmem:[%s196 + $0x128] sm:$0xff]
        %v402 = vld [vmem:[%s196 + $0x130] sm:$0xff]
        %v403 = vld [vmem:[%s196 + $0x138] sm:$0xff]
        %v404 = vld [vmem:[%s196 + $0x140] sm:$0xff]
        %v405 = vld [vmem:[%s196 + $0x148] sm:$0xff]
        %v406 = vld [vmem:[%s196 + $0x150] sm:$0xff]
        %v407 = vld [vmem:[%s196 + $0x158] sm:$0xff]
        %v408 = vld [vmem:[%s196 + $0x160] sm:$0xff]
        %v409 = vld [vmem:[%s196 + $0x168] sm:$0xff]
        %v410 = vld [vmem:[%s196 + $0x170] sm:$0xff]
        %v411 = vld [vmem:[%s196 + $0x178] sm:$0xff]
        %v412 = vld [vmem:[%s196 + $0x180] sm:$0xff]
        %v413 = vld [vmem:[%s196 + $0x188] sm:$0xff]
        %v414 = vld [vmem:[%s196 + $0x190] sm:$0xff]
        %v415 = vld [vmem:[%s196 + $0x198] sm:$0xff]
        %v416 = vld [vmem:[%s196 + $0x1a0] sm:$0xff]
        %v417 = vld [vmem:[%s196 + $0x1a8] sm:$0xff]
        %v418 = vld [vmem:[%s196 + $0x1b0] sm:$0xff]
        %v419 = vld [vmem:[%s196 + $0x1b8] sm:$0xff]
        %v420 = vld [vmem:[%s196 + $0x1c0] sm:$0xff]
        %v421 = vld [vmem:[%s196 + $0x1c8] sm:$0xff]
        %v422 = vld [vmem:[%s196 + $0x1d0] sm:$0xff]
        %v423 = vld [vmem:[%s196 + $0x1d8] sm:$0xff]
        %v424 = vld [vmem:[%s196 + $0x1e0] sm:$0xff]
        %v425 = vld [vmem:[%s196 + $0x1e8] sm:$0xff]
        %v426 = vld [vmem:[%s196 + $0x1f0] sm:$0xff]
        %v427 = vld [vmem:[%s196 + $0x1f8] sm:$0xff]
        %v428 = vld [vmem:[%s196 + $0x200] sm:$0xff]
        %v429 = vld [vmem:[%s196 + $0x208] sm:$0xff]
        %v430 = vld [vmem:[%s196 + $0x210] sm:$0xff]
        %v431 = vld [vmem:[%s196 + $0x218] sm:$0xff]
        %v432 = vld [vmem:[%s196 + $0x220] sm:$0xff]
        %v433 = vld [vmem:[%s196 + $0x228] sm:$0xff]
        %v434 = vld [vmem:[%s196 + $0x230] sm:$0xff]
        %v435 = vld [vmem:[%s196 + $0x238] sm:$0xff]
        %v436 = vld [vmem:[%s196 + $0x240] sm:$0xff]
        %v437 = vld [vmem:[%s196 + $0x248] sm:$0xff]
        %v438 = vld [vmem:[%s196 + $0x250] sm:$0xff]
        %v439 = vld [vmem:[%s196 + $0x258] sm:$0xff]
        %v440 = vld [vmem:[%s196 + $0x260] sm:$0xff]
        %v441 = vld [vmem:[%s196 + $0x268] sm:$0xff]
        %v442 = vld [vmem:[%s196 + $0x270] sm:$0xff]
        %v443 = vld [vmem:[%s196 + $0x278] sm:$0xff]
        %v444 = vld [vmem:[%s196 + $0x280] sm:$0xff]
        %v445 = vld [vmem:[%s196 + $0x288] sm:$0xff]
        %v446 = vld [vmem:[%s196 + $0x290] sm:$0xff]
        %v447 = vld [vmem:[%s196 + $0x298] sm:$0xff]
        %v448 = vld [vmem:[%s196 + $0x2a0] sm:$0xff]
        %v449 = vld [vmem:[%s196 + $0x2a8] sm:$0xff]
        %v450 = vld [vmem:[%s196 + $0x2b0] sm:$0xff]
        %v451 = vld [vmem:[%s196 + $0x2b8] sm:$0xff]
        %v452 = vld [vmem:[%s196 + $0x2c0] sm:$0xff]
        %v453 = vld [vmem:[%s196 + $0x2c8] sm:$0xff]
        %v454 = vld [vmem:[%s196 + $0x2d0] sm:$0xff]
        %v455 = vld [vmem:[%s196 + $0x2d8] sm:$0xff]
        %v456 = vld [vmem:[%s196 + $0x2e0] sm:$0xff]
        %v457 = vld [vmem:[%s196 + $0x2e8] sm:$0xff]
        %v458 = vld [vmem:[%s196 + $0x2f0] sm:$0xff]
        %v459 = vld [vmem:[%s196 + $0x2f8] sm:$0xff]
        %v460 = vld [vmem:[%s196 + $0x300] sm:$0xff]
        %v461 = vld [vmem:[%s196 + $0x308] sm:$0xff]
        %v462 = vld [vmem:[%s196 + $0x310] sm:$0xff]
        %v463 = vld [vmem:[%s196 + $0x318] sm:$0xff]
        %v464 = vld [vmem:[%s196 + $0x320] sm:$0xff]
        %v465 = vld [vmem:[%s196 + $0x328] sm:$0xff]
        %v466 = vld [vmem:[%s196 + $0x330] sm:$0xff]
        %v467 = vld [vmem:[%s196 + $0x338] sm:$0xff]
        %v468 = vld [vmem:[%s196 + $0x340] sm:$0xff]
        %v469 = vld [vmem:[%s196 + $0x348] sm:$0xff]
        %v470 = vld [vmem:[%s196 + $0x350] sm:$0xff]
        %v471 = vld [vmem:[%s196 + $0x358] sm:$0xff]
        %v472 = vld [vmem:[%s196 + $0x360] sm:$0xff]
        %v473 = vld [vmem:[%s196 + $0x368] sm:$0xff]
        %v474 = vld [vmem:[%s196 + $0x370] sm:$0xff]
        %v475 = vld [vmem:[%s196 + $0x378] sm:$0xff]
        %v476 = vld [vmem:[%s196 + $0x380] sm:$0xff]
        %v477 = vld [vmem:[%s196 + $0x388] sm:$0xff]
        %v478 = vld [vmem:[%s196 + $0x390] sm:$0xff]
        %v479 = vld [vmem:[%s196 + $0x398] sm:$0xff]
        %v480 = vld [vmem:[%s196 + $0x3a0] sm:$0xff]
        %v481 = vld [vmem:[%s196 + $0x3a8] sm:$0xff]
        %v482 = vld [vmem:[%s196 + $0x3b0] sm:$0xff]
        %v483 = vld [vmem:[%s196 + $0x3b8] sm:$0xff]
        %v484 = vld [vmem:[%s196 + $0x3c0] sm:$0xff]
        %v485 = vld [vmem:[%s196 + $0x3c8] sm:$0xff]
        %v486 = vld [vmem:[%s196 + $0x3d0] sm:$0xff]
        %v487 = vld [vmem:[%s196 + $0x3d8] sm:$0xff]
        %v488 = vld [vmem:[%s196 + $0x3e0] sm:$0xff]
        %v489 = vld [vmem:[%s196 + $0x3e8] sm:$0xff]
        %v490 = vld [vmem:[%s196 + $0x3f0] sm:$0xff]
        %v491 = vld [vmem:[%s196 + $0x3f8] sm:$0xff]
        %v492 = vpack.c.bf16 %v368, %v364
        %v493 = vpack.c.bf16 %v369, %v365
        %v494 = vpack.c.bf16 %v370, %v366
        %v495 = vpack.c.bf16 %v371, %v367
        %v496 = vpack.c.bf16 %v376, %v372
        %v497 = vpack.c.bf16 %v377, %v373
        %v498 = vpack.c.bf16 %v378, %v374
        %v499 = vpack.c.bf16 %v379, %v375
        %v500 = vpack.c.bf16 %v384, %v380
        %v501 = vpack.c.bf16 %v385, %v381
        %v502 = vpack.c.bf16 %v386, %v382
        %v503 = vpack.c.bf16 %v387, %v383
        %v504 = vpack.c.bf16 %v392, %v388
        %v505 = vpack.c.bf16 %v393, %v389
        %v506 = vpack.c.bf16 %v394, %v390
        %v507 = vpack.c.bf16 %v395, %v391
        %v508 = vpack.c.bf16 %v400, %v396
        %v509 = vpack.c.bf16 %v401, %v397
        %v510 = vpack.c.bf16 %v402, %v398
        %v511 = vpack.c.bf16 %v403, %v399
        %v512 = vpack.c.bf16 %v408, %v404
        %v513 = vpack.c.bf16 %v409, %v405
        %v514 = vpack.c.bf16 %v410, %v406
        %v515 = vpack.c.bf16 %v411, %v407
        %v516 = vpack.c.bf16 %v416, %v412
        %v517 = vpack.c.bf16 %v417, %v413
        %v518 = vpack.c.bf16 %v418, %v414
        %v519 = vpack.c.bf16 %v419, %v415
        %v520 = vpack.c.bf16 %v424, %v420
        %v521 = vpack.c.bf16 %v425, %v421
        %v522 = vpack.c.bf16 %v426, %v422
        %v523 = vpack.c.bf16 %v427, %v423
        %v524 = vpack.c.bf16 %v432, %v428
        %v525 = vpack.c.bf16 %v433, %v429
        %v526 = vpack.c.bf16 %v434, %v430
        %v527 = vpack.c.bf16 %v435, %v431
        %v528 = vpack.c.bf16 %v440, %v436
        %v529 = vpack.c.bf16 %v441, %v437
        %v530 = vpack.c.bf16 %v442, %v438
        %v531 = vpack.c.bf16 %v443, %v439
        %v532 = vpack.c.bf16 %v448, %v444
        %v533 = vpack.c.bf16 %v449, %v445
        %v534 = vpack.c.bf16 %v450, %v446
        %v535 = vpack.c.bf16 %v451, %v447
        %v536 = vpack.c.bf16 %v456, %v452
        %v537 = vpack.c.bf16 %v457, %v453
        %v538 = vpack.c.bf16 %v458, %v454
        %v539 = vpack.c.bf16 %v459, %v455
        %v540 = vpack.c.bf16 %v464, %v460
        %v541 = vpack.c.bf16 %v465, %v461
        %v542 = vpack.c.bf16 %v466, %v462
        %v543 = vpack.c.bf16 %v467, %v463
        %v544 = vpack.c.bf16 %v472, %v468
        %v545 = vpack.c.bf16 %v473, %v469
        %v546 = vpack.c.bf16 %v474, %v470
        %v547 = vpack.c.bf16 %v475, %v471
        %v548 = vpack.c.bf16 %v480, %v476
        %v549 = vpack.c.bf16 %v481, %v477
        %v550 = vpack.c.bf16 %v482, %v478
        %v551 = vpack.c.bf16 %v483, %v479
        %v552 = vpack.c.bf16 %v488, %v484
        %v553 = vpack.c.bf16 %v489, %v485
        %v554 = vpack.c.bf16 %v490, %v486
        %v555 = vpack.c.bf16 %v491, %v487
        %v556 = vld [vmem:[%s205] sm:$0xff]
        %v557 = vld [vmem:[%s205 + $0x8] sm:$0xff]
        %v558 = vld [vmem:[%s205 + $0x10] sm:$0xff]
        %v559 = vld [vmem:[%s205 + $0x18] sm:$0xff]
        %v560 = vld [vmem:[%s205 + $0x20] sm:$0xff]
        %v561 = vld [vmem:[%s205 + $0x28] sm:$0xff]
        %v562 = vld [vmem:[%s205 + $0x30] sm:$0xff]
        %v563 = vld [vmem:[%s205 + $0x38] sm:$0xff]
        %v564 = vld [vmem:[%s205 + $0x40] sm:$0xff]
        %v565 = vld [vmem:[%s205 + $0x48] sm:$0xff]
        %v566 = vld [vmem:[%s205 + $0x50] sm:$0xff]
        %v567 = vld [vmem:[%s205 + $0x58] sm:$0xff]
        %v568 = vld [vmem:[%s205 + $0x60] sm:$0xff]
        %v569 = vld [vmem:[%s205 + $0x68] sm:$0xff]
        %v570 = vld [vmem:[%s205 + $0x70] sm:$0xff]
        %v571 = vld [vmem:[%s205 + $0x78] sm:$0xff]
        %v572 = vld [vmem:[%s205 + $0x80] sm:$0xff]
        %v573 = vld [vmem:[%s205 + $0x88] sm:$0xff]
        %v574 = vld [vmem:[%s205 + $0x90] sm:$0xff]
        %v575 = vld [vmem:[%s205 + $0x98] sm:$0xff]
        %v576 = vld [vmem:[%s205 + $0xa0] sm:$0xff]
        %v577 = vld [vmem:[%s205 + $0xa8] sm:$0xff]
        %v578 = vld [vmem:[%s205 + $0xb0] sm:$0xff]
        %v579 = vld [vmem:[%s205 + $0xb8] sm:$0xff]
        %v580 = vld [vmem:[%s205 + $0xc0] sm:$0xff]
        %v581 = vld [vmem:[%s205 + $0xc8] sm:$0xff]
        %v582 = vld [vmem:[%s205 + $0xd0] sm:$0xff]
        %v583 = vld [vmem:[%s205 + $0xd8] sm:$0xff]
        %v584 = vld [vmem:[%s205 + $0xe0] sm:$0xff]
        %v585 = vld [vmem:[%s205 + $0xe8] sm:$0xff]
        %v586 = vld [vmem:[%s205 + $0xf0] sm:$0xff]
        %v587 = vld [vmem:[%s205 + $0xf8] sm:$0xff]
        %v588 = vld [vmem:[%s205 + $0x100] sm:$0xff]
        %v589 = vld [vmem:[%s205 + $0x108] sm:$0xff]
        %v590 = vld [vmem:[%s205 + $0x110] sm:$0xff]
        %v591 = vld [vmem:[%s205 + $0x118] sm:$0xff]
        %v592 = vld [vmem:[%s205 + $0x120] sm:$0xff]
        %v593 = vld [vmem:[%s205 + $0x128] sm:$0xff]
        %v594 = vld [vmem:[%s205 + $0x130] sm:$0xff]
        %v595 = vld [vmem:[%s205 + $0x138] sm:$0xff]
        %v596 = vld [vmem:[%s205 + $0x140] sm:$0xff]
        %v597 = vld [vmem:[%s205 + $0x148] sm:$0xff]
        %v598 = vld [vmem:[%s205 + $0x150] sm:$0xff]
        %v599 = vld [vmem:[%s205 + $0x158] sm:$0xff]
        %v600 = vld [vmem:[%s205 + $0x160] sm:$0xff]
        %v601 = vld [vmem:[%s205 + $0x168] sm:$0xff]
        %v602 = vld [vmem:[%s205 + $0x170] sm:$0xff]
        %v603 = vld [vmem:[%s205 + $0x178] sm:$0xff]
        %v604 = vld [vmem:[%s205 + $0x180] sm:$0xff]
        %v605 = vld [vmem:[%s205 + $0x188] sm:$0xff]
        %v606 = vld [vmem:[%s205 + $0x190] sm:$0xff]
        %v607 = vld [vmem:[%s205 + $0x198] sm:$0xff]
        %v608 = vld [vmem:[%s205 + $0x1a0] sm:$0xff]
        %v609 = vld [vmem:[%s205 + $0x1a8] sm:$0xff]
        %v610 = vld [vmem:[%s205 + $0x1b0] sm:$0xff]
        %v611 = vld [vmem:[%s205 + $0x1b8] sm:$0xff]
        %v612 = vld [vmem:[%s205 + $0x1c0] sm:$0xff]
        %v613 = vld [vmem:[%s205 + $0x1c8] sm:$0xff]
        %v614 = vld [vmem:[%s205 + $0x1d0] sm:$0xff]
        %v615 = vld [vmem:[%s205 + $0x1d8] sm:$0xff]
        %v616 = vld [vmem:[%s205 + $0x1e0] sm:$0xff]
        %v617 = vld [vmem:[%s205 + $0x1e8] sm:$0xff]
        %v618 = vld [vmem:[%s205 + $0x1f0] sm:$0xff]
        %v619 = vld [vmem:[%s205 + $0x1f8] sm:$0xff]
        %v620 = vld [vmem:[%s205 + $0x200] sm:$0xff]
        %v621 = vld [vmem:[%s205 + $0x208] sm:$0xff]
        %v622 = vld [vmem:[%s205 + $0x210] sm:$0xff]
        %v623 = vld [vmem:[%s205 + $0x218] sm:$0xff]
        %v624 = vld [vmem:[%s205 + $0x220] sm:$0xff]
        %v625 = vld [vmem:[%s205 + $0x228] sm:$0xff]
        %v626 = vld [vmem:[%s205 + $0x230] sm:$0xff]
        %v627 = vld [vmem:[%s205 + $0x238] sm:$0xff]
        %v628 = vld [vmem:[%s205 + $0x240] sm:$0xff]
        %v629 = vld [vmem:[%s205 + $0x248] sm:$0xff]
        %v630 = vld [vmem:[%s205 + $0x250] sm:$0xff]
        %v631 = vld [vmem:[%s205 + $0x258] sm:$0xff]
        %v632 = vld [vmem:[%s205 + $0x260] sm:$0xff]
        %v633 = vld [vmem:[%s205 + $0x268] sm:$0xff]
        %v634 = vld [vmem:[%s205 + $0x270] sm:$0xff]
        %v635 = vld [vmem:[%s205 + $0x278] sm:$0xff]
        %v636 = vld [vmem:[%s205 + $0x280] sm:$0xff]
        %v637 = vld [vmem:[%s205 + $0x288] sm:$0xff]
        %v638 = vld [vmem:[%s205 + $0x290] sm:$0xff]
        %v639 = vld [vmem:[%s205 + $0x298] sm:$0xff]
        %v640 = vld [vmem:[%s205 + $0x2a0] sm:$0xff]
        %v641 = vld [vmem:[%s205 + $0x2a8] sm:$0xff]
        %v642 = vld [vmem:[%s205 + $0x2b0] sm:$0xff]
        %v643 = vld [vmem:[%s205 + $0x2b8] sm:$0xff]
        %v644 = vld [vmem:[%s205 + $0x2c0] sm:$0xff]
        %v645 = vld [vmem:[%s205 + $0x2c8] sm:$0xff]
        %v646 = vld [vmem:[%s205 + $0x2d0] sm:$0xff]
        %v647 = vld [vmem:[%s205 + $0x2d8] sm:$0xff]
        %v648 = vld [vmem:[%s205 + $0x2e0] sm:$0xff]
        %v649 = vld [vmem:[%s205 + $0x2e8] sm:$0xff]
        %v650 = vld [vmem:[%s205 + $0x2f0] sm:$0xff]
        %v651 = vld [vmem:[%s205 + $0x2f8] sm:$0xff]
        %v652 = vld [vmem:[%s205 + $0x300] sm:$0xff]
        %v653 = vld [vmem:[%s205 + $0x308] sm:$0xff]
        %v654 = vld [vmem:[%s205 + $0x310] sm:$0xff]
        %v655 = vld [vmem:[%s205 + $0x318] sm:$0xff]
        %v656 = vld [vmem:[%s205 + $0x320] sm:$0xff]
        %v657 = vld [vmem:[%s205 + $0x328] sm:$0xff]
        %v658 = vld [vmem:[%s205 + $0x330] sm:$0xff]
        %v659 = vld [vmem:[%s205 + $0x338] sm:$0xff]
        %v660 = vld [vmem:[%s205 + $0x340] sm:$0xff]
        %v661 = vld [vmem:[%s205 + $0x348] sm:$0xff]
        %v662 = vld [vmem:[%s205 + $0x350] sm:$0xff]
        %v663 = vld [vmem:[%s205 + $0x358] sm:$0xff]
        %v664 = vld [vmem:[%s205 + $0x360] sm:$0xff]
        %v665 = vld [vmem:[%s205 + $0x368] sm:$0xff]
        %v666 = vld [vmem:[%s205 + $0x370] sm:$0xff]
        %v667 = vld [vmem:[%s205 + $0x378] sm:$0xff]
        %v668 = vld [vmem:[%s205 + $0x380] sm:$0xff]
        %v669 = vld [vmem:[%s205 + $0x388] sm:$0xff]
        %v670 = vld [vmem:[%s205 + $0x390] sm:$0xff]
        %v671 = vld [vmem:[%s205 + $0x398] sm:$0xff]
        %v672 = vld [vmem:[%s205 + $0x3a0] sm:$0xff]
        %v673 = vld [vmem:[%s205 + $0x3a8] sm:$0xff]
        %v674 = vld [vmem:[%s205 + $0x3b0] sm:$0xff]
        %v675 = vld [vmem:[%s205 + $0x3b8] sm:$0xff]
        %v676 = vld [vmem:[%s205 + $0x3c0] sm:$0xff]
        %v677 = vld [vmem:[%s205 + $0x3c8] sm:$0xff]
        %v678 = vld [vmem:[%s205 + $0x3d0] sm:$0xff]
        %v679 = vld [vmem:[%s205 + $0x3d8] sm:$0xff]
        %v680 = vld [vmem:[%s205 + $0x3e0] sm:$0xff]
        %v681 = vld [vmem:[%s205 + $0x3e8] sm:$0xff]
        %v682 = vld [vmem:[%s205 + $0x3f0] sm:$0xff]
        %v683 = vld [vmem:[%s205 + $0x3f8] sm:$0xff]
        %v684 = vpack.c.bf16 %v558, %v556
        %v685 = vpack.c.bf16 %v559, %v557
        %v686 = vpack.c.bf16 %v562, %v560
        %v687 = vpack.c.bf16 %v563, %v561
        %v688 = vpack.c.bf16 %v566, %v564
        %v689 = vpack.c.bf16 %v567, %v565
        %v690 = vpack.c.bf16 %v570, %v568
        %v691 = vpack.c.bf16 %v571, %v569
        %v692 = vpack.c.bf16 %v574, %v572
        %v693 = vpack.c.bf16 %v575, %v573
        %v694 = vpack.c.bf16 %v578, %v576
        %v695 = vpack.c.bf16 %v579, %v577
        %v696 = vpack.c.bf16 %v582, %v580
        %v697 = vpack.c.bf16 %v583, %v581
        %v698 = vpack.c.bf16 %v586, %v584
        %v699 = vpack.c.bf16 %v587, %v585
        %v700 = vpack.c.bf16 %v590, %v588
        %v701 = vpack.c.bf16 %v591, %v589
        %v702 = vpack.c.bf16 %v594, %v592
        %v703 = vpack.c.bf16 %v595, %v593
        %v704 = vpack.c.bf16 %v598, %v596
        %v705 = vpack.c.bf16 %v599, %v597
        %v706 = vpack.c.bf16 %v602, %v600
        %v707 = vpack.c.bf16 %v603, %v601
        %v708 = vpack.c.bf16 %v606, %v604
        %v709 = vpack.c.bf16 %v607, %v605
        %v710 = vpack.c.bf16 %v610, %v608
        %v711 = vpack.c.bf16 %v611, %v609
        %v712 = vpack.c.bf16 %v614, %v612
        %v713 = vpack.c.bf16 %v615, %v613
        %v714 = vpack.c.bf16 %v618, %v616
        %v715 = vpack.c.bf16 %v619, %v617
        %v716 = vpack.c.bf16 %v622, %v620
        %v717 = vpack.c.bf16 %v623, %v621
        %v718 = vpack.c.bf16 %v626, %v624
        %v719 = vpack.c.bf16 %v627, %v625
        %v720 = vpack.c.bf16 %v630, %v628
        %v721 = vpack.c.bf16 %v631, %v629
        %v722 = vpack.c.bf16 %v634, %v632
        %v723 = vpack.c.bf16 %v635, %v633
        %v724 = vpack.c.bf16 %v638, %v636
        %v725 = vpack.c.bf16 %v639, %v637
        %v726 = vpack.c.bf16 %v642, %v640
        %v727 = vpack.c.bf16 %v643, %v641
        %v728 = vpack.c.bf16 %v646, %v644
        %v729 = vpack.c.bf16 %v647, %v645
        %v730 = vpack.c.bf16 %v650, %v648
        %v731 = vpack.c.bf16 %v651, %v649
        %v732 = vpack.c.bf16 %v654, %v652
        %v733 = vpack.c.bf16 %v655, %v653
        %v734 = vpack.c.bf16 %v658, %v656
        %v735 = vpack.c.bf16 %v659, %v657
        %v736 = vpack.c.bf16 %v662, %v660
        %v737 = vpack.c.bf16 %v663, %v661
        %v738 = vpack.c.bf16 %v666, %v664
        %v739 = vpack.c.bf16 %v667, %v665
        %v740 = vpack.c.bf16 %v670, %v668
        %v741 = vpack.c.bf16 %v671, %v669
        %v742 = vpack.c.bf16 %v674, %v672
        %v743 = vpack.c.bf16 %v675, %v673
        %v744 = vpack.c.bf16 %v678, %v676
        %v745 = vpack.c.bf16 %v679, %v677
        %v746 = vpack.c.bf16 %v682, %v680
        %v747 = vpack.c.bf16 %v683, %v681
        %748 = vmatprep.subr.bf16.mxu0 %v699
        %749 = vmatpush1.bf16.msra.mxu0 %v698
        %750 = vmatprep.subr.bf16.mxu0 %v697
        %751 = vmatpush1.bf16.msra.mxu0 %v696
        %752 = vmatprep.subr.bf16.mxu0 %v695
        %753 = vmatpush1.bf16.msra.mxu0 %v694
        %754 = vmatprep.subr.bf16.mxu0 %v693
        %755 = vmatpush1.bf16.msra.mxu0 %v692
        %756 = vmatprep.subr.bf16.mxu0 %v691
        %757 = vmatpush1.bf16.msra.mxu0 %v690
        %758 = vmatprep.subr.bf16.mxu0 %v689
        %759 = vmatpush1.bf16.msra.mxu0 %v688
        %760 = vmatprep.subr.bf16.mxu0 %v687
        %761 = vmatpush1.bf16.msra.mxu0 %v686
        %762 = vmatprep.subr.bf16.mxu0 %v685
        %763 = vmatpush1.bf16.msra.mxu0 %v684
        %764 = vmatprep.subr.bf16.mxu0 %v715
        %765 = vmatpush2.bf16.msra.mxu0 %v714
        %766 = vmatprep.subr.bf16.mxu0 %v713
        %767 = vmatpush2.bf16.msra.mxu0 %v712
        %768 = vmatprep.subr.bf16.mxu0 %v711
        %769 = vmatpush2.bf16.msra.mxu0 %v710
        %770 = vmatprep.subr.bf16.mxu0 %v709
        %771 = vmatpush2.bf16.msra.mxu0 %v708
        %772 = vmatprep.subr.bf16.mxu0 %v707
        %773 = vmatpush2.bf16.msra.mxu0 %v706
        %774 = vmatprep.subr.bf16.mxu0 %v705
        %775 = vmatpush2.bf16.msra.mxu0 %v704
        %776 = vmatprep.subr.bf16.mxu0 %v703
        %777 = vmatpush2.bf16.msra.mxu0 %v702
        %778 = vmatprep.subr.bf16.mxu0 %v701
        %779 = vmatpush2.bf16.msra.mxu0 %v700
        %780 = vmatprep.mubr.bf16.mxu0 %v493
        %781 = vmatmul.mubr.bf16.gmra.mxu0 %v492
        %v782 = vpop.f32.mrf.mxu0
        %v783 = vadd.f32 0.0, %v782
        %v784 = vpop.f32.mrf.mxu0
        %v785 = vadd.f32 0.0, %v784
        %v786 = vpop.f32.mrf.mxu0
        %v787 = vadd.f32 0.0, %v786
        %v788 = vpop.f32.mrf.mxu0
        %v789 = vadd.f32 0.0, %v788
        %790 = vmatprep.mubr.bf16.mxu0 %v497
        %791 = vmatmul.mubr.bf16.gmra.mxu0 %v496
        %v792 = vpop.f32.mrf.mxu0
        %v793 = vadd.f32 0.0, %v792
        %v794 = vpop.f32.mrf.mxu0
        %v795 = vadd.f32 0.0, %v794
        %v796 = vpop.f32.mrf.mxu0
        %v797 = vadd.f32 0.0, %v796
        %v798 = vpop.f32.mrf.mxu0
        %v799 = vadd.f32 0.0, %v798
        %800 = vmatprep.mubr.bf16.mxu0 %v501
        %801 = vmatmul.mubr.bf16.gmra.mxu0 %v500
        %v802 = vpop.f32.mrf.mxu0
        %v803 = vadd.f32 0.0, %v802
        %v804 = vpop.f32.mrf.mxu0
        %v805 = vadd.f32 0.0, %v804
        %v806 = vpop.f32.mrf.mxu0
        %v807 = vadd.f32 0.0, %v806
        %v808 = vpop.f32.mrf.mxu0
        %v809 = vadd.f32 0.0, %v808
        %810 = vmatprep.mubr.bf16.mxu0 %v505
        %811 = vmatmul.mubr.bf16.gmra.mxu0 %v504
        %v812 = vpop.f32.mrf.mxu0
        %v813 = vadd.f32 0.0, %v812
        %v814 = vpop.f32.mrf.mxu0
        %v815 = vadd.f32 0.0, %v814
        %v816 = vpop.f32.mrf.mxu0
        %v817 = vadd.f32 0.0, %v816
        %v818 = vpop.f32.mrf.mxu0
        %v819 = vadd.f32 0.0, %v818
        %820 = vmatprep.mubr.bf16.mxu0 %v509
        %821 = vmatmul.mubr.bf16.gmra.mxu0 %v508
        %v822 = vpop.f32.mrf.mxu0
        %v823 = vadd.f32 0.0, %v822
        %v824 = vpop.f32.mrf.mxu0
        %v825 = vadd.f32 0.0, %v824
        %v826 = vpop.f32.mrf.mxu0
        %v827 = vadd.f32 0.0, %v826
        %v828 = vpop.f32.mrf.mxu0
        %v829 = vadd.f32 0.0, %v828
        %830 = vmatprep.mubr.bf16.mxu0 %v513
        %831 = vmatmul.mubr.bf16.gmra.mxu0 %v512
        %v832 = vpop.f32.mrf.mxu0
        %v833 = vadd.f32 0.0, %v832
        %v834 = vpop.f32.mrf.mxu0
        %v835 = vadd.f32 0.0, %v834
        %v836 = vpop.f32.mrf.mxu0
        %v837 = vadd.f32 0.0, %v836
        %v838 = vpop.f32.mrf.mxu0
        %v839 = vadd.f32 0.0, %v838
        %840 = vmatprep.mubr.bf16.mxu0 %v517
        %841 = vmatmul.mubr.bf16.gmra.mxu0 %v516
        %v842 = vpop.f32.mrf.mxu0
        %v843 = vadd.f32 0.0, %v842
        %v844 = vpop.f32.mrf.mxu0
        %v845 = vadd.f32 0.0, %v844
        %v846 = vpop.f32.mrf.mxu0
        %v847 = vadd.f32 0.0, %v846
        %v848 = vpop.f32.mrf.mxu0
        %v849 = vadd.f32 0.0, %v848
        %850 = vmatprep.mubr.bf16.mxu0 %v521
        %851 = vmatmul.mubr.bf16.gmra.mxu0 %v520
        %v852 = vpop.f32.mrf.mxu0
        %v853 = vadd.f32 0.0, %v852
        %v854 = vpop.f32.mrf.mxu0
        %v855 = vadd.f32 0.0, %v854
        %v856 = vpop.f32.mrf.mxu0
        %v857 = vadd.f32 0.0, %v856
        %v858 = vpop.f32.mrf.mxu0
        %v859 = vadd.f32 0.0, %v858
        %860 = vmatprep.mubr.bf16.mxu0 %v525
        %861 = vmatmul.mubr.bf16.gmra.mxu0 %v524
        %v862 = vpop.f32.mrf.mxu0
        %v863 = vadd.f32 0.0, %v862
        %v864 = vpop.f32.mrf.mxu0
        %v865 = vadd.f32 0.0, %v864
        %v866 = vpop.f32.mrf.mxu0
        %v867 = vadd.f32 0.0, %v866
        %v868 = vpop.f32.mrf.mxu0
        %v869 = vadd.f32 0.0, %v868
        %870 = vmatprep.mubr.bf16.mxu0 %v529
        %871 = vmatmul.mubr.bf16.gmra.mxu0 %v528
        %v872 = vpop.f32.mrf.mxu0
        %v873 = vadd.f32 0.0, %v872
        %v874 = vpop.f32.mrf.mxu0
        %v875 = vadd.f32 0.0, %v874
        %v876 = vpop.f32.mrf.mxu0
        %v877 = vadd.f32 0.0, %v876
        %v878 = vpop.f32.mrf.mxu0
        %v879 = vadd.f32 0.0, %v878
        %880 = vmatprep.mubr.bf16.mxu0 %v533
        %881 = vmatmul.mubr.bf16.gmra.mxu0 %v532
        %v882 = vpop.f32.mrf.mxu0
        %v883 = vadd.f32 0.0, %v882
        %v884 = vpop.f32.mrf.mxu0
        %v885 = vadd.f32 0.0, %v884
        %v886 = vpop.f32.mrf.mxu0
        %v887 = vadd.f32 0.0, %v886
        %v888 = vpop.f32.mrf.mxu0
        %v889 = vadd.f32 0.0, %v888
        %890 = vmatprep.mubr.bf16.mxu0 %v537
        %891 = vmatmul.mubr.bf16.gmra.mxu0 %v536
        %v892 = vpop.f32.mrf.mxu0
        %v893 = vadd.f32 0.0, %v892
        %v894 = vpop.f32.mrf.mxu0
        %v895 = vadd.f32 0.0, %v894
        %v896 = vpop.f32.mrf.mxu0
        %v897 = vadd.f32 0.0, %v896
        %v898 = vpop.f32.mrf.mxu0
        %v899 = vadd.f32 0.0, %v898
        %900 = vmatprep.mubr.bf16.mxu0 %v541
        %901 = vmatmul.mubr.bf16.gmra.mxu0 %v540
        %v902 = vpop.f32.mrf.mxu0
        %v903 = vadd.f32 0.0, %v902
        %v904 = vpop.f32.mrf.mxu0
        %v905 = vadd.f32 0.0, %v904
        %v906 = vpop.f32.mrf.mxu0
        %v907 = vadd.f32 0.0, %v906
        %v908 = vpop.f32.mrf.mxu0
        %v909 = vadd.f32 0.0, %v908
        %910 = vmatprep.mubr.bf16.mxu0 %v545
        %911 = vmatmul.mubr.bf16.gmra.mxu0 %v544
        %v912 = vpop.f32.mrf.mxu0
        %v913 = vadd.f32 0.0, %v912
        %v914 = vpop.f32.mrf.mxu0
        %v915 = vadd.f32 0.0, %v914
        %v916 = vpop.f32.mrf.mxu0
        %v917 = vadd.f32 0.0, %v916
        %v918 = vpop.f32.mrf.mxu0
        %v919 = vadd.f32 0.0, %v918
        %920 = vmatprep.mubr.bf16.mxu0 %v549
        %921 = vmatmul.mubr.bf16.gmra.mxu0 %v548
        %v922 = vpop.f32.mrf.mxu0
        %v923 = vadd.f32 0.0, %v922
        %v924 = vpop.f32.mrf.mxu0
        %v925 = vadd.f32 0.0, %v924
        %v926 = vpop.f32.mrf.mxu0
        %v927 = vadd.f32 0.0, %v926
        %v928 = vpop.f32.mrf.mxu0
        %v929 = vadd.f32 0.0, %v928
        %930 = vmatprep.mubr.bf16.mxu0 %v553
        %931 = vmatmul.mubr.bf16.gmra.mxu0 %v552
        %v932 = vpop.f32.mrf.mxu0
        %v933 = vadd.f32 0.0, %v932
        %v934 = vpop.f32.mrf.mxu0
        %v935 = vadd.f32 0.0, %v934
        %v936 = vpop.f32.mrf.mxu0
        %v937 = vadd.f32 0.0, %v936
        %v938 = vpop.f32.mrf.mxu0
        %v939 = vadd.f32 0.0, %v938
        %940 = vdwg.mxu0
        %941 = vmatprep.subr.bf16.mxu0 %v731
        %942 = vmatpush1.bf16.msra.mxu0 %v730
        %943 = vmatprep.subr.bf16.mxu0 %v729
        %944 = vmatpush1.bf16.msra.mxu0 %v728
        %945 = vmatprep.subr.bf16.mxu0 %v727
        %946 = vmatpush1.bf16.msra.mxu0 %v726
        %947 = vmatprep.subr.bf16.mxu0 %v725
        %948 = vmatpush1.bf16.msra.mxu0 %v724
        %949 = vmatprep.subr.bf16.mxu0 %v723
        %950 = vmatpush1.bf16.msra.mxu0 %v722
        %951 = vmatprep.subr.bf16.mxu0 %v721
        %952 = vmatpush1.bf16.msra.mxu0 %v720
        %953 = vmatprep.subr.bf16.mxu0 %v719
        %954 = vmatpush1.bf16.msra.mxu0 %v718
        %955 = vmatprep.subr.bf16.mxu0 %v717
        %956 = vmatpush1.bf16.msra.mxu0 %v716
        %957 = vmatprep.subr.bf16.mxu0 %v747
        %958 = vmatpush2.bf16.msra.mxu0 %v746
        %959 = vmatprep.subr.bf16.mxu0 %v745
        %960 = vmatpush2.bf16.msra.mxu0 %v744
        %961 = vmatprep.subr.bf16.mxu0 %v743
        %962 = vmatpush2.bf16.msra.mxu0 %v742
        %963 = vmatprep.subr.bf16.mxu0 %v741
        %964 = vmatpush2.bf16.msra.mxu0 %v740
        %965 = vmatprep.subr.bf16.mxu0 %v739
        %966 = vmatpush2.bf16.msra.mxu0 %v738
        %967 = vmatprep.subr.bf16.mxu0 %v737
        %968 = vmatpush2.bf16.msra.mxu0 %v736
        %969 = vmatprep.subr.bf16.mxu0 %v735
        %970 = vmatpush2.bf16.msra.mxu0 %v734
        %971 = vmatprep.subr.bf16.mxu0 %v733
        %972 = vmatpush2.bf16.msra.mxu0 %v732
        %973 = vmatprep.mubr.bf16.mxu0 %v495
        %974 = vmatmul.mubr.bf16.gmra.mxu0 %v494
        %v975 = vpop.f32.mrf.mxu0
        %v976 = vadd.f32 %v783, %v975
        %v977 = vpop.f32.mrf.mxu0
        %v978 = vadd.f32 %v785, %v977
        %v979 = vpop.f32.mrf.mxu0
        %v980 = vadd.f32 %v787, %v979
        %v981 = vpop.f32.mrf.mxu0
        %v982 = vadd.f32 %v789, %v981
        %983 = vmatprep.mubr.bf16.mxu0 %v499
        %984 = vmatmul.mubr.bf16.gmra.mxu0 %v498
        %v985 = vpop.f32.mrf.mxu0
        %v986 = vadd.f32 %v793, %v985
        %v987 = vpop.f32.mrf.mxu0
        %v988 = vadd.f32 %v795, %v987
        %v989 = vpop.f32.mrf.mxu0
        %v990 = vadd.f32 %v797, %v989
        %v991 = vpop.f32.mrf.mxu0
        %v992 = vadd.f32 %v799, %v991
        %993 = vmatprep.mubr.bf16.mxu0 %v503
        %994 = vmatmul.mubr.bf16.gmra.mxu0 %v502
        %v995 = vpop.f32.mrf.mxu0
        %v996 = vadd.f32 %v803, %v995
        %v997 = vpop.f32.mrf.mxu0
        %v998 = vadd.f32 %v805, %v997
        %v999 = vpop.f32.mrf.mxu0
        %v1000 = vadd.f32 %v807, %v999
        %v1001 = vpop.f32.mrf.mxu0
        %v1002 = vadd.f32 %v809, %v1001
        %1003 = vmatprep.mubr.bf16.mxu0 %v507
        %1004 = vmatmul.mubr.bf16.gmra.mxu0 %v506
        %v1005 = vpop.f32.mrf.mxu0
        %v1006 = vadd.f32 %v813, %v1005
        %v1007 = vpop.f32.mrf.mxu0
        %v1008 = vadd.f32 %v815, %v1007
        %v1009 = vpop.f32.mrf.mxu0
        %v1010 = vadd.f32 %v817, %v1009
        %v1011 = vpop.f32.mrf.mxu0
        %v1012 = vadd.f32 %v819, %v1011
        %1013 = vmatprep.mubr.bf16.mxu0 %v511
        %1014 = vmatmul.mubr.bf16.gmra.mxu0 %v510
        %v1015 = vpop.f32.mrf.mxu0
        %v1016 = vadd.f32 %v823, %v1015
        %v1017 = vpop.f32.mrf.mxu0
        %v1018 = vadd.f32 %v825, %v1017
        %v1019 = vpop.f32.mrf.mxu0
        %v1020 = vadd.f32 %v827, %v1019
        %v1021 = vpop.f32.mrf.mxu0
        %v1022 = vadd.f32 %v829, %v1021
        %1023 = vmatprep.mubr.bf16.mxu0 %v515
        %1024 = vmatmul.mubr.bf16.gmra.mxu0 %v514
        %v1025 = vpop.f32.mrf.mxu0
        %v1026 = vadd.f32 %v833, %v1025
        %v1027 = vpop.f32.mrf.mxu0
        %v1028 = vadd.f32 %v835, %v1027
        %v1029 = vpop.f32.mrf.mxu0
        %v1030 = vadd.f32 %v837, %v1029
        %v1031 = vpop.f32.mrf.mxu0
        %v1032 = vadd.f32 %v839, %v1031
        %1033 = vmatprep.mubr.bf16.mxu0 %v519
        %1034 = vmatmul.mubr.bf16.gmra.mxu0 %v518
        %v1035 = vpop.f32.mrf.mxu0
        %v1036 = vadd.f32 %v843, %v1035
        %v1037 = vpop.f32.mrf.mxu0
        %v1038 = vadd.f32 %v845, %v1037
        %v1039 = vpop.f32.mrf.mxu0
        %v1040 = vadd.f32 %v847, %v1039
        %v1041 = vpop.f32.mrf.mxu0
        %v1042 = vadd.f32 %v849, %v1041
        %1043 = vmatprep.mubr.bf16.mxu0 %v523
        %1044 = vmatmul.mubr.bf16.gmra.mxu0 %v522
        %v1045 = vpop.f32.mrf.mxu0
        %v1046 = vadd.f32 %v853, %v1045
        %v1047 = vpop.f32.mrf.mxu0
        %v1048 = vadd.f32 %v855, %v1047
        %v1049 = vpop.f32.mrf.mxu0
        %v1050 = vadd.f32 %v857, %v1049
        %v1051 = vpop.f32.mrf.mxu0
        %v1052 = vadd.f32 %v859, %v1051
        %1053 = vmatprep.mubr.bf16.mxu0 %v527
        %1054 = vmatmul.mubr.bf16.gmra.mxu0 %v526
        %v1055 = vpop.f32.mrf.mxu0
        %v1056 = vadd.f32 %v863, %v1055
        %v1057 = vpop.f32.mrf.mxu0
        %v1058 = vadd.f32 %v865, %v1057
        %v1059 = vpop.f32.mrf.mxu0
        %v1060 = vadd.f32 %v867, %v1059
        %v1061 = vpop.f32.mrf.mxu0
        %v1062 = vadd.f32 %v869, %v1061
        %1063 = vmatprep.mubr.bf16.mxu0 %v531
        %1064 = vmatmul.mubr.bf16.gmra.mxu0 %v530
        %v1065 = vpop.f32.mrf.mxu0
        %v1066 = vadd.f32 %v873, %v1065
        %v1067 = vpop.f32.mrf.mxu0
        %v1068 = vadd.f32 %v875, %v1067
        %v1069 = vpop.f32.mrf.mxu0
        %v1070 = vadd.f32 %v877, %v1069
        %v1071 = vpop.f32.mrf.mxu0
        %v1072 = vadd.f32 %v879, %v1071
        %1073 = vmatprep.mubr.bf16.mxu0 %v535
        %1074 = vmatmul.mubr.bf16.gmra.mxu0 %v534
        %v1075 = vpop.f32.mrf.mxu0
        %v1076 = vadd.f32 %v883, %v1075
        %v1077 = vpop.f32.mrf.mxu0
        %v1078 = vadd.f32 %v885, %v1077
        %v1079 = vpop.f32.mrf.mxu0
        %v1080 = vadd.f32 %v887, %v1079
        %v1081 = vpop.f32.mrf.mxu0
        %v1082 = vadd.f32 %v889, %v1081
        %1083 = vmatprep.mubr.bf16.mxu0 %v539
        %1084 = vmatmul.mubr.bf16.gmra.mxu0 %v538
        %v1085 = vpop.f32.mrf.mxu0
        %v1086 = vadd.f32 %v893, %v1085
        %v1087 = vpop.f32.mrf.mxu0
        %v1088 = vadd.f32 %v895, %v1087
        %v1089 = vpop.f32.mrf.mxu0
        %v1090 = vadd.f32 %v897, %v1089
        %v1091 = vpop.f32.mrf.mxu0
        %v1092 = vadd.f32 %v899, %v1091
        %1093 = vmatprep.mubr.bf16.mxu0 %v543
        %1094 = vmatmul.mubr.bf16.gmra.mxu0 %v542
        %v1095 = vpop.f32.mrf.mxu0
        %v1096 = vadd.f32 %v903, %v1095
        %v1097 = vpop.f32.mrf.mxu0
        %v1098 = vadd.f32 %v905, %v1097
        %v1099 = vpop.f32.mrf.mxu0
        %v1100 = vadd.f32 %v907, %v1099
        %v1101 = vpop.f32.mrf.mxu0
        %v1102 = vadd.f32 %v909, %v1101
        %1103 = vmatprep.mubr.bf16.mxu0 %v547
        %1104 = vmatmul.mubr.bf16.gmra.mxu0 %v546
        %v1105 = vpop.f32.mrf.mxu0
        %v1106 = vadd.f32 %v913, %v1105
        %v1107 = vpop.f32.mrf.mxu0
        %v1108 = vadd.f32 %v915, %v1107
        %v1109 = vpop.f32.mrf.mxu0
        %v1110 = vadd.f32 %v917, %v1109
        %v1111 = vpop.f32.mrf.mxu0
        %v1112 = vadd.f32 %v919, %v1111
        %1113 = vmatprep.mubr.bf16.mxu0 %v551
        %1114 = vmatmul.mubr.bf16.gmra.mxu0 %v550
        %v1115 = vpop.f32.mrf.mxu0
        %v1116 = vadd.f32 %v923, %v1115
        %v1117 = vpop.f32.mrf.mxu0
        %v1118 = vadd.f32 %v925, %v1117
        %v1119 = vpop.f32.mrf.mxu0
        %v1120 = vadd.f32 %v927, %v1119
        %v1121 = vpop.f32.mrf.mxu0
        %v1122 = vadd.f32 %v929, %v1121
        %1123 = vmatprep.mubr.bf16.mxu0 %v555
        %1124 = vmatmul.mubr.bf16.gmra.mxu0 %v554
        %v1125 = vpop.f32.mrf.mxu0
        %v1126 = vadd.f32 %v933, %v1125
        %v1127 = vpop.f32.mrf.mxu0
        %v1128 = vadd.f32 %v935, %v1127
        %v1129 = vpop.f32.mrf.mxu0
        %v1130 = vadd.f32 %v937, %v1129
        %v1131 = vpop.f32.mrf.mxu0
        %v1132 = vadd.f32 %v939, %v1131
        %1133 = vdwg.mxu0
        %v1134 = vadd.f32 %v300, %v976
        %v1135 = vadd.f32 %v301, %v978
        %v1136 = vadd.f32 %v302, %v980
        %v1137 = vadd.f32 %v303, %v982
        %v1138 = vadd.f32 %v304, %v986
        %v1139 = vadd.f32 %v305, %v988
        %v1140 = vadd.f32 %v306, %v990
        %v1141 = vadd.f32 %v307, %v992
        %v1142 = vadd.f32 %v308, %v996
        %v1143 = vadd.f32 %v309, %v998
        %v1144 = vadd.f32 %v310, %v1000
        %v1145 = vadd.f32 %v311, %v1002
        %v1146 = vadd.f32 %v312, %v1006
        %v1147 = vadd.f32 %v313, %v1008
        %v1148 = vadd.f32 %v314, %v1010
        %v1149 = vadd.f32 %v315, %v1012
        %v1150 = vadd.f32 %v316, %v1016
        %v1151 = vadd.f32 %v317, %v1018
        %v1152 = vadd.f32 %v318, %v1020
        %v1153 = vadd.f32 %v319, %v1022
        %v1154 = vadd.f32 %v320, %v1026
        %v1155 = vadd.f32 %v321, %v1028
        %v1156 = vadd.f32 %v322, %v1030
        %v1157 = vadd.f32 %v323, %v1032
        %v1158 = vadd.f32 %v324, %v1036
        %v1159 = vadd.f32 %v325, %v1038
        %v1160 = vadd.f32 %v326, %v1040
        %v1161 = vadd.f32 %v327, %v1042
        %v1162 = vadd.f32 %v328, %v1046
        %v1163 = vadd.f32 %v329, %v1048
        %v1164 = vadd.f32 %v330, %v1050
        %v1165 = vadd.f32 %v331, %v1052
        %v1166 = vadd.f32 %v332, %v1056
        %v1167 = vadd.f32 %v333, %v1058
        %v1168 = vadd.f32 %v334, %v1060
        %v1169 = vadd.f32 %v335, %v1062
        %v1170 = vadd.f32 %v336, %v1066
        %v1171 = vadd.f32 %v337, %v1068
        %v1172 = vadd.f32 %v338, %v1070
        %v1173 = vadd.f32 %v339, %v1072
        %v1174 = vadd.f32 %v340, %v1076
        %v1175 = vadd.f32 %v341, %v1078
        %v1176 = vadd.f32 %v342, %v1080
        %v1177 = vadd.f32 %v343, %v1082
        %v1178 = vadd.f32 %v344, %v1086
        %v1179 = vadd.f32 %v345, %v1088
        %v1180 = vadd.f32 %v346, %v1090
        %v1181 = vadd.f32 %v347, %v1092
        %v1182 = vadd.f32 %v348, %v1096
        %v1183 = vadd.f32 %v349, %v1098
        %v1184 = vadd.f32 %v350, %v1100
        %v1185 = vadd.f32 %v351, %v1102
        %v1186 = vadd.f32 %v352, %v1106
        %v1187 = vadd.f32 %v353, %v1108
        %v1188 = vadd.f32 %v354, %v1110
        %v1189 = vadd.f32 %v355, %v1112
        %v1190 = vadd.f32 %v356, %v1116
        %v1191 = vadd.f32 %v357, %v1118
        %v1192 = vadd.f32 %v358, %v1120
        %v1193 = vadd.f32 %v359, %v1122
        %v1194 = vadd.f32 %v360, %v1126
        %v1195 = vadd.f32 %v361, %v1128
        %v1196 = vadd.f32 %v362, %v1130
        %v1197 = vadd.f32 %v363, %v1132
        %1198 = vst [vmem:[#allocation2] sm:$0xff] %v1134
        %1199 = vst [vmem:[#allocation2 + $0x8] sm:$0xff] %v1135
        %1200 = vst [vmem:[#allocation2 + $0x10] sm:$0xff] %v1136
        %1201 = vst [vmem:[#allocation2 + $0x18] sm:$0xff] %v1137
        %1202 = vst [vmem:[#allocation2 + $0x20] sm:$0xff] %v1138
        %1203 = vst [vmem:[#allocation2 + $0x28] sm:$0xff] %v1139
        %1204 = vst [vmem:[#allocation2 + $0x30] sm:$0xff] %v1140
        %1205 = vst [vmem:[#allocation2 + $0x38] sm:$0xff] %v1141
        %1206 = vst [vmem:[#allocation2 + $0x40] sm:$0xff] %v1142
        %1207 = vst [vmem:[#allocation2 + $0x48] sm:$0xff] %v1143
        %1208 = vst [vmem:[#allocation2 + $0x50] sm:$0xff] %v1144
        %1209 = vst [vmem:[#allocation2 + $0x58] sm:$0xff] %v1145
        %1210 = vst [vmem:[#allocation2 + $0x60] sm:$0xff] %v1146
        %1211 = vst [vmem:[#allocation2 + $0x68] sm:$0xff] %v1147
        %1212 = vst [vmem:[#allocation2 + $0x70] sm:$0xff] %v1148
        %1213 = vst [vmem:[#allocation2 + $0x78] sm:$0xff] %v1149
        %1214 = vst [vmem:[#allocation2 + $0x80] sm:$0xff] %v1150
        %1215 = vst [vmem:[#allocation2 + $0x88] sm:$0xff] %v1151
        %1216 = vst [vmem:[#allocation2 + $0x90] sm:$0xff] %v1152
        %1217 = vst [vmem:[#allocation2 + $0x98] sm:$0xff] %v1153
        %1218 = vst [vmem:[#allocation2 + $0xa0] sm:$0xff] %v1154
        %1219 = vst [vmem:[#allocation2 + $0xa8] sm:$0xff] %v1155
        %1220 = vst [vmem:[#allocation2 + $0xb0] sm:$0xff] %v1156
        %1221 = vst [vmem:[#allocation2 + $0xb8] sm:$0xff] %v1157
        %1222 = vst [vmem:[#allocation2 + $0xc0] sm:$0xff] %v1158
        %1223 = vst [vmem:[#allocation2 + $0xc8] sm:$0xff] %v1159
        %1224 = vst [vmem:[#allocation2 + $0xd0] sm:$0xff] %v1160
        %1225 = vst [vmem:[#allocation2 + $0xd8] sm:$0xff] %v1161
        %1226 = vst [vmem:[#allocation2 + $0xe0] sm:$0xff] %v1162
        %1227 = vst [vmem:[#allocation2 + $0xe8] sm:$0xff] %v1163
        %1228 = vst [vmem:[#allocation2 + $0xf0] sm:$0xff] %v1164
        %1229 = vst [vmem:[#allocation2 + $0xf8] sm:$0xff] %v1165
        %1230 = vst [vmem:[#allocation2 + $0x100] sm:$0xff] %v1166
        %1231 = vst [vmem:[#allocation2 + $0x108] sm:$0xff] %v1167
        %1232 = vst [vmem:[#allocation2 + $0x110] sm:$0xff] %v1168
        %1233 = vst [vmem:[#allocation2 + $0x118] sm:$0xff] %v1169
        %1234 = vst [vmem:[#allocation2 + $0x120] sm:$0xff] %v1170
        %1235 = vst [vmem:[#allocation2 + $0x128] sm:$0xff] %v1171
        %1236 = vst [vmem:[#allocation2 + $0x130] sm:$0xff] %v1172
        %1237 = vst [vmem:[#allocation2 + $0x138] sm:$0xff] %v1173
        %1238 = vst [vmem:[#allocation2 + $0x140] sm:$0xff] %v1174
        %1239 = vst [vmem:[#allocation2 + $0x148] sm:$0xff] %v1175
        %1240 = vst [vmem:[#allocation2 + $0x150] sm:$0xff] %v1176
        %1241 = vst [vmem:[#allocation2 + $0x158] sm:$0xff] %v1177
        %1242 = vst [vmem:[#allocation2 + $0x160] sm:$0xff] %v1178
        %1243 = vst [vmem:[#allocation2 + $0x168] sm:$0xff] %v1179
        %1244 = vst [vmem:[#allocation2 + $0x170] sm:$0xff] %v1180
        %1245 = vst [vmem:[#allocation2 + $0x178] sm:$0xff] %v1181
        %1246 = vst [vmem:[#allocation2 + $0x180] sm:$0xff] %v1182
        %1247 = vst [vmem:[#allocation2 + $0x188] sm:$0xff] %v1183
        %1248 = vst [vmem:[#allocation2 + $0x190] sm:$0xff] %v1184
        %1249 = vst [vmem:[#allocation2 + $0x198] sm:$0xff] %v1185
        %1250 = vst [vmem:[#allocation2 + $0x1a0] sm:$0xff] %v1186
        %1251 = vst [vmem:[#allocation2 + $0x1a8] sm:$0xff] %v1187
        %1252 = vst [vmem:[#allocation2 + $0x1b0] sm:$0xff] %v1188
        %1253 = vst [vmem:[#allocation2 + $0x1b8] sm:$0xff] %v1189
        %1254 = vst [vmem:[#allocation2 + $0x1c0] sm:$0xff] %v1190
        %1255 = vst [vmem:[#allocation2 + $0x1c8] sm:$0xff] %v1191
        %1256 = vst [vmem:[#allocation2 + $0x1d0] sm:$0xff] %v1192
        %1257 = vst [vmem:[#allocation2 + $0x1d8] sm:$0xff] %v1193
        %1258 = vst [vmem:[#allocation2 + $0x1e0] sm:$0xff] %v1194
        %1259 = vst [vmem:[#allocation2 + $0x1e8] sm:$0xff] %v1195
        %1260 = vst [vmem:[#allocation2 + $0x1f0] sm:$0xff] %v1196
        %1261 = vst [vmem:[#allocation2 + $0x1f8] sm:$0xff] %v1197
        %p1262 = scmp.eq.s32.totalorder %s27, 1
        // Predicated region
        $region41: #{tpu_custom_call.1} parent=27 // pred_check
          %p1263 = pneg %p1262
        $region42: #{tpu_custom_call.1} parent=27 // pred_check_branch
          %1265 = sbr.rel (%p1263) target = $region44
        $region43: #{tpu_custom_call.1} parent=27 // pred_region
          %v1266 = vld [vmem:[#allocation2] sm:$0xff]
          %v1267 = vld [vmem:[#allocation2 + $0x8] sm:$0xff]
          %v1268 = vld [vmem:[#allocation2 + $0x10] sm:$0xff]
          %v1269 = vld [vmem:[#allocation2 + $0x18] sm:$0xff]
          %v1270 = vld [vmem:[#allocation2 + $0x20] sm:$0xff]
          %v1271 = vld [vmem:[#allocation2 + $0x28] sm:$0xff]
          %v1272 = vld [vmem:[#allocation2 + $0x30] sm:$0xff]
          %v1273 = vld [vmem:[#allocation2 + $0x38] sm:$0xff]
          %v1274 = vld [vmem:[#allocation2 + $0x40] sm:$0xff]
          %v1275 = vld [vmem:[#allocation2 + $0x48] sm:$0xff]
          %v1276 = vld [vmem:[#allocation2 + $0x50] sm:$0xff]
          %v1277 = vld [vmem:[#allocation2 + $0x58] sm:$0xff]
          %v1278 = vld [vmem:[#allocation2 + $0x60] sm:$0xff]
          %v1279 = vld [vmem:[#allocation2 + $0x68] sm:$0xff]
          %v1280 = vld [vmem:[#allocation2 + $0x70] sm:$0xff]
          %v1281 = vld [vmem:[#allocation2 + $0x78] sm:$0xff]
          %v1282 = vld [vmem:[#allocation2 + $0x80] sm:$0xff]
          %v1283 = vld [vmem:[#allocation2 + $0x88] sm:$0xff]
          %v1284 = vld [vmem:[#allocation2 + $0x90] sm:$0xff]
          %v1285 = vld [vmem:[#allocation2 + $0x98] sm:$0xff]
          %v1286 = vld [vmem:[#allocation2 + $0xa0] sm:$0xff]
          %v1287 = vld [vmem:[#allocation2 + $0xa8] sm:$0xff]
          %v1288 = vld [vmem:[#allocation2 + $0xb0] sm:$0xff]
          %v1289 = vld [vmem:[#allocation2 + $0xb8] sm:$0xff]
          %v1290 = vld [vmem:[#allocation2 + $0xc0] sm:$0xff]
          %v1291 = vld [vmem:[#allocation2 + $0xc8] sm:$0xff]
          %v1292 = vld [vmem:[#allocation2 + $0xd0] sm:$0xff]
          %v1293 = vld [vmem:[#allocation2 + $0xd8] sm:$0xff]
          %v1294 = vld [vmem:[#allocation2 + $0xe0] sm:$0xff]
          %v1295 = vld [vmem:[#allocation2 + $0xe8] sm:$0xff]
          %v1296 = vld [vmem:[#allocation2 + $0xf0] sm:$0xff]
          %v1297 = vld [vmem:[#allocation2 + $0xf8] sm:$0xff]
          %v1298 = vld [vmem:[#allocation2 + $0x100] sm:$0xff]
          %v1299 = vld [vmem:[#allocation2 + $0x108] sm:$0xff]
          %v1300 = vld [vmem:[#allocation2 + $0x110] sm:$0xff]
          %v1301 = vld [vmem:[#allocation2 + $0x118] sm:$0xff]
          %v1302 = vld [vmem:[#allocation2 + $0x120] sm:$0xff]
          %v1303 = vld [vmem:[#allocation2 + $0x128] sm:$0xff]
          %v1304 = vld [vmem:[#allocation2 + $0x130] sm:$0xff]
          %v1305 = vld [vmem:[#allocation2 + $0x138] sm:$0xff]
          %v1306 = vld [vmem:[#allocation2 + $0x140] sm:$0xff]
          %v1307 = vld [vmem:[#allocation2 + $0x148] sm:$0xff]
          %v1308 = vld [vmem:[#allocation2 + $0x150] sm:$0xff]
          %v1309 = vld [vmem:[#allocation2 + $0x158] sm:$0xff]
          %v1310 = vld [vmem:[#allocation2 + $0x160] sm:$0xff]
          %v1311 = vld [vmem:[#allocation2 + $0x168] sm:$0xff]
          %v1312 = vld [vmem:[#allocation2 + $0x170] sm:$0xff]
          %v1313 = vld [vmem:[#allocation2 + $0x178] sm:$0xff]
          %v1314 = vld [vmem:[#allocation2 + $0x180] sm:$0xff]
          %v1315 = vld [vmem:[#allocation2 + $0x188] sm:$0xff]
          %v1316 = vld [vmem:[#allocation2 + $0x190] sm:$0xff]
          %v1317 = vld [vmem:[#allocation2 + $0x198] sm:$0xff]
          %v1318 = vld [vmem:[#allocation2 + $0x1a0] sm:$0xff]
          %v1319 = vld [vmem:[#allocation2 + $0x1a8] sm:$0xff]
          %v1320 = vld [vmem:[#allocation2 + $0x1b0] sm:$0xff]
          %v1321 = vld [vmem:[#allocation2 + $0x1b8] sm:$0xff]
          %v1322 = vld [vmem:[#allocation2 + $0x1c0] sm:$0xff]
          %v1323 = vld [vmem:[#allocation2 + $0x1c8] sm:$0xff]
          %v1324 = vld [vmem:[#allocation2 + $0x1d0] sm:$0xff]
          %v1325 = vld [vmem:[#allocation2 + $0x1d8] sm:$0xff]
          %v1326 = vld [vmem:[#allocation2 + $0x1e0] sm:$0xff]
          %v1327 = vld [vmem:[#allocation2 + $0x1e8] sm:$0xff]
          %v1328 = vld [vmem:[#allocation2 + $0x1f0] sm:$0xff]
          %v1329 = vld [vmem:[#allocation2 + $0x1f8] sm:$0xff]
          %1330 = vst [vmem:[#allocation8] sm:$0xff] %v1266
          %1331 = vst [vmem:[#allocation8 + $0x8] sm:$0xff] %v1267
          %1332 = vst [vmem:[#allocation8 + $0x10] sm:$0xff] %v1268
          %1333 = vst [vmem:[#allocation8 + $0x18] sm:$0xff] %v1269
          %1334 = vst [vmem:[#allocation8 + $0x20] sm:$0xff] %v1270
          %1335 = vst [vmem:[#allocation8 + $0x28] sm:$0xff] %v1271
          %1336 = vst [vmem:[#allocation8 + $0x30] sm:$0xff] %v1272
          %1337 = vst [vmem:[#allocation8 + $0x38] sm:$0xff] %v1273
          %1338 = vst [vmem:[#allocation8 + $0x40] sm:$0xff] %v1274
          %1339 = vst [vmem:[#allocation8 + $0x48] sm:$0xff] %v1275
          %1340 = vst [vmem:[#allocation8 + $0x50] sm:$0xff] %v1276
          %1341 = vst [vmem:[#allocation8 + $0x58] sm:$0xff] %v1277
          %1342 = vst [vmem:[#allocation8 + $0x60] sm:$0xff] %v1278
          %1343 = vst [vmem:[#allocation8 + $0x68] sm:$0xff] %v1279
          %1344 = vst [vmem:[#allocation8 + $0x70] sm:$0xff] %v1280
          %1345 = vst [vmem:[#allocation8 + $0x78] sm:$0xff] %v1281
          %1346 = vst [vmem:[#allocation8 + $0x80] sm:$0xff] %v1282
          %1347 = vst [vmem:[#allocation8 + $0x88] sm:$0xff] %v1283
          %1348 = vst [vmem:[#allocation8 + $0x90] sm:$0xff] %v1284
          %1349 = vst [vmem:[#allocation8 + $0x98] sm:$0xff] %v1285
          %1350 = vst [vmem:[#allocation8 + $0xa0] sm:$0xff] %v1286
          %1351 = vst [vmem:[#allocation8 + $0xa8] sm:$0xff] %v1287
          %1352 = vst [vmem:[#allocation8 + $0xb0] sm:$0xff] %v1288
          %1353 = vst [vmem:[#allocation8 + $0xb8] sm:$0xff] %v1289
          %1354 = vst [vmem:[#allocation8 + $0xc0] sm:$0xff] %v1290
          %1355 = vst [vmem:[#allocation8 + $0xc8] sm:$0xff] %v1291
          %1356 = vst [vmem:[#allocation8 + $0xd0] sm:$0xff] %v1292
          %1357 = vst [vmem:[#allocation8 + $0xd8] sm:$0xff] %v1293
          %1358 = vst [vmem:[#allocation8 + $0xe0] sm:$0xff] %v1294
          %1359 = vst [vmem:[#allocation8 + $0xe8] sm:$0xff] %v1295
          %1360 = vst [vmem:[#allocation8 + $0xf0] sm:$0xff] %v1296
          %1361 = vst [vmem:[#allocation8 + $0xf8] sm:$0xff] %v1297
          %1362 = vst [vmem:[#allocation8 + $0x100] sm:$0xff] %v1298
          %1363 = vst [vmem:[#allocation8 + $0x108] sm:$0xff] %v1299
          %1364 = vst [vmem:[#allocation8 + $0x110] sm:$0xff] %v1300
          %1365 = vst [vmem:[#allocation8 + $0x118] sm:$0xff] %v1301
          %1366 = vst [vmem:[#allocation8 + $0x120] sm:$0xff] %v1302
          %1367 = vst [vmem:[#allocation8 + $0x128] sm:$0xff] %v1303
          %1368 = vst [vmem:[#allocation8 + $0x130] sm:$0xff] %v1304
          %1369 = vst [vmem:[#allocation8 + $0x138] sm:$0xff] %v1305
          %1370 = vst [vmem:[#allocation8 + $0x140] sm:$0xff] %v1306
          %1371 = vst [vmem:[#allocation8 + $0x148] sm:$0xff] %v1307
          %1372 = vst [vmem:[#allocation8 + $0x150] sm:$0xff] %v1308
          %1373 = vst [vmem:[#allocation8 + $0x158] sm:$0xff] %v1309
          %1374 = vst [vmem:[#allocation8 + $0x160] sm:$0xff] %v1310
          %1375 = vst [vmem:[#allocation8 + $0x168] sm:$0xff] %v1311
          %1376 = vst [vmem:[#allocation8 + $0x170] sm:$0xff] %v1312
          %1377 = vst [vmem:[#allocation8 + $0x178] sm:$0xff] %v1313
          %1378 = vst [vmem:[#allocation8 + $0x180] sm:$0xff] %v1314
          %1379 = vst [vmem:[#allocation8 + $0x188] sm:$0xff] %v1315
          %1380 = vst [vmem:[#allocation8 + $0x190] sm:$0xff] %v1316
          %1381 = vst [vmem:[#allocation8 + $0x198] sm:$0xff] %v1317
          %1382 = vst [vmem:[#allocation8 + $0x1a0] sm:$0xff] %v1318
          %1383 = vst [vmem:[#allocation8 + $0x1a8] sm:$0xff] %v1319
          %1384 = vst [vmem:[#allocation8 + $0x1b0] sm:$0xff] %v1320
          %1385 = vst [vmem:[#allocation8 + $0x1b8] sm:$0xff] %v1321
          %1386 = vst [vmem:[#allocation8 + $0x1c0] sm:$0xff] %v1322
          %1387 = vst [vmem:[#allocation8 + $0x1c8] sm:$0xff] %v1323
          %1388 = vst [vmem:[#allocation8 + $0x1d0] sm:$0xff] %v1324
          %1389 = vst [vmem:[#allocation8 + $0x1d8] sm:$0xff] %v1325
          %1390 = vst [vmem:[#allocation8 + $0x1e0] sm:$0xff] %v1326
          %1391 = vst [vmem:[#allocation8 + $0x1e8] sm:$0xff] %v1327
          %1392 = vst [vmem:[#allocation8 + $0x1f0] sm:$0xff] %v1328
          %1393 = vst [vmem:[#allocation8 + $0x1f8] sm:$0xff] %v1329
        $region44: #{tpu_custom_call.1} parent=27 // pred_fallthru
          _
        // Predicated region
        $region45: #{tpu_custom_call.1} parent=27 // pred_check
          %p1394 = pneg %p115
        $region46: #{tpu_custom_call.1} parent=27 // pred_check_branch
          %1396 = sbr.rel (%p1394) target = $region48
        $region47: #{tpu_custom_call.1} parent=27 // pred_region
          %s1397 = smul.u32 32, %s25
          %s1398 = smul.u32 2, %s26
          %s1400 = ssub.s32 8192, 8192
          %1401 = vsyncadd [#allocation5], %s1400
          %s1402 = smul.addr %s1397, 2
          %s1403 = sadd.s32 %s1398, %s1402
          %s1404 = smul.addr %s1403, 128
          %s1405 = scalar_lea.hbm %s2, %s1404
          %s1406 = sshll.u32 [#allocation8], 4
          %s1407 = int_to_ptr.vmem [resolvable:$true] %s1406
          %1412 = dma.vmem_to_hbm [thread:$0]  %s1407, 8192, %s1405, [#allocation5], 256, 256, 16
        $region48: #{tpu_custom_call.1} parent=27 // pred_fallthru
          _
        // Predicated region
        $region49: #{tpu_custom_call.1} parent=27 // pred_check
          %p1413 = pneg %p115
        $region50: #{tpu_custom_call.1} parent=27 // pred_check_branch
          %1415 = sbr.rel (%p1413) target = $region52
        $region51: #{tpu_custom_call.1} parent=27 // pred_region
          %1416 = dma.done [#allocation5], 8192
        $region52: #{tpu_custom_call.1} parent=27 // pred_fallthru
          _
      $region28: #{tpu_custom_call.1} parent=5 // pred_fallthru
        _
      %p1417 = scmp.le.s32.totalorder 2, %s15
      // Predicated region
      $region53: #{tpu_custom_call.1} parent=5 // pred_check
        %p1418 = pneg %p1417
      $region54: #{tpu_custom_call.1} parent=5 // pred_check_branch
        %1420 = sbr.rel (%p1418) target = $region56
      $region55: #{tpu_custom_call.1} parent=5 // pred_region
        %s1421 = ssub.s32 %s15, 2
      $region56: #{tpu_custom_call.1} parent=5 // pred_fallthru
        _
    $region6: #{tpu_custom_call.1} parent=1 // loop_footer
      %s19 = sadd.s32 1, %s15
    $region7: #{tpu_custom_call.1} parent=1 // loop_footer_branch
      %14 = sbr.rel target = $region3
    $region8: #{tpu_custom_call.1} parent=1 // loop_exit
      _
    %1422 = vsyncpa [#allocation4], 1
    %s1423 = scalar_lea.sflag [#allocation4], 1
    %1424 = vsyncpa %s1423, 1
    %1425 = vsyncpa [#allocation7], 1
    %s1426 = scalar_lea.sflag [#allocation7], 1
    %1427 = vsyncpa %s1426, 1
    %1428 = vsyncpa [#allocation5], 1
    %s1429 = scalar_lea.sflag [#allocation5], 1
    %1430 = vsyncpa %s1429, 1

</llo_original>
